<compile_context>
chip_gen: v5e
topology: v5e:2x2
jax: 0.10.0
libtpu: 0.0.40
codegen_flags: <defaults>
</compile_context>

<pallas_src>
import functools
import math

import jax
import jax.numpy as jnp
from jax import lax
from jax.experimental import pallas as pl
from jax.experimental.pallas import tpu as pltpu


def _gelu_new(x):
    # HF "gelu_new": 0.5 * x * (1 + tanh(sqrt(2/pi) * (x + 0.044715 * x^3)))
    c = math.sqrt(2.0 / math.pi)
    return 0.5 * x * (1.0 + jnp.tanh(c * (x + 0.044715 * x * x * x)))


def _layer_norm(x, gamma, beta, eps):
    mean = jnp.mean(x, axis=-1, keepdims=True)
    var = jnp.mean(jnp.square(x - mean), axis=-1, keepdims=True)
    return (x - mean) * lax.rsqrt(var + eps) * gamma + beta


def albert_layer_kernel(
    # inputs
    x_ref, mask_ref, head_mask_ref,
    wq_ref, bq_ref, wk_ref, bk_ref, wv_ref, bv_ref,
    wd_ref, bd_ref, g_attn_ref, b_attn_ref,
    w_ffn_ref, b_ffn_ref, w_ffo_ref, b_ffo_ref,
    g_ffn_ref, b_ffn_ln_ref,
    # output
    o_ref,
    *, num_heads, eps):
    x = x_ref[0].astype(jnp.float32)                 # (S, H)
    S, H = x.shape
    D = H // num_heads
    scale = 1.0 / math.sqrt(D)

    amask = mask_ref[0].astype(jnp.float32)          # (1, S) additive mask

    # Fused Q/K/V projections (MXU, f32 accumulation).
    q = jnp.dot(x, wq_ref[...], preferred_element_type=jnp.float32) + bq_ref[...]
    k = jnp.dot(x, wk_ref[...], preferred_element_type=jnp.float32) + bk_ref[...]
    v = jnp.dot(x, wv_ref[...], preferred_element_type=jnp.float32) + bv_ref[...]

    # Per-head attention.  Heads are contiguous D-wide slices of the hidden dim.
    # The output projection is accumulated per head (ctx_h @ Wd[hD:(h+1)D, :]),
    # which avoids a lane-concat of the head contexts.
    proj = jnp.zeros((S, H), jnp.float32)
    for h in range(num_heads):
        sl = slice(h * D, (h + 1) * D)
        qh = q[:, sl]                                 # (S, D)
        kh = k[:, sl]
        vh = v[:, sl]
        # scores = qh @ kh^T / sqrt(D) + mask        (contract over D, no transpose)
        s = lax.dot_general(qh, kh, (((1,), (1,)), ((), ())),
                            preferred_element_type=jnp.float32) * scale
        s = s + amask                                 # broadcast over query rows
        s = s - jnp.max(s, axis=-1, keepdims=True)
        p = jnp.exp(s)
        p = p / jnp.sum(p, axis=-1, keepdims=True)
        # TODO(synk): attention-prob dropout omitted (eval mode).
        hm_h = head_mask_ref[h]                       # scalar from SMEM
        ctx_h = jnp.dot(p, vh, preferred_element_type=jnp.float32) * hm_h
        proj = proj + jnp.dot(ctx_h, wd_ref[h * D:(h + 1) * D, :],
                              preferred_element_type=jnp.float32)
    proj = proj + bd_ref[...]

    # Residual + attention LayerNorm.
    attn_out = _layer_norm(x + proj, g_attn_ref[...], b_attn_ref[...], eps)

    # Feed-forward (gelu_new) + residual + full-layer LayerNorm.
    f = jnp.dot(attn_out, w_ffn_ref[...], preferred_element_type=jnp.float32) + b_ffn_ref[...]
    f = _gelu_new(f)
    f = jnp.dot(f, w_ffo_ref[...], preferred_element_type=jnp.float32) + b_ffo_ref[...]

    y = _layer_norm(f + attn_out, g_ffn_ref[...], b_ffn_ln_ref[...], eps)
    o_ref[0] = y.astype(o_ref.dtype)


def albert_layer(x, attn_mask3, head_mask_l, params, *, num_heads, eps):
    """One AlbertLayer forward: x (B, S, H) -> (B, S, H)."""
    B, S, H = x.shape
    (wq, bq, wk, bk, wv, bv, wd, bd,
     g1, be1, w1, bb1, w2, bb2, g2, be2) = params
    I = w1.shape[1]

    def rep(shape):
        nd = len(shape)
        return pl.BlockSpec(shape, lambda b, _nd=nd: (0,) * _nd)  # weights: constant block

    in_specs = [
        pl.BlockSpec((1, S, H), lambda b: (b, 0, 0)),       # hidden states (per batch row)
        pl.BlockSpec((1, 1, S), lambda b: (b, 0, 0)),       # additive attention mask
        pl.BlockSpec(memory_space=pltpu.MemorySpace.SMEM),  # head mask (NH,) scalars
        rep((H, H)), rep((1, H)),                           # Wq, bq
        rep((H, H)), rep((1, H)),                           # Wk, bk
        rep((H, H)), rep((1, H)),                           # Wv, bv
        rep((H, H)), rep((1, H)),                           # Wd (attention output), bd
        rep((1, H)), rep((1, H)),                           # attention LayerNorm gamma, beta
        rep((H, I)), rep((1, I)),                           # ffn
        rep((I, H)), rep((1, H)),                           # ffn_output
        rep((1, H)), rep((1, H)),                           # full-layer LayerNorm gamma, beta
    ]

    return pl.pallas_call(
        functools.partial(albert_layer_kernel, num_heads=num_heads, eps=eps),
        out_shape=jax.ShapeDtypeStruct((B, S, H), x.dtype),
        grid=(B,),
        in_specs=in_specs,
        out_specs=pl.BlockSpec((1, S, H), lambda b: (b, 0, 0)),
        compiler_params=pltpu.CompilerParams(dimension_semantics=("parallel",)),
    )(x, attn_mask3, head_mask_l, wq, bq, wk, bk, wv, bv, wd, bd,
      g1, be1, w1, bb1, w2, bb2, g2, be2)


def albert_layer_group(hidden_states, attention_mask, head_mask, layer_params,
                       *, num_heads, eps=1e-12):
    """AlbertLayerGroup.forward (default path): returns final hidden states."""
    B, S, H = hidden_states.shape
    if attention_mask is None:
        attention_mask = jnp.zeros((B, S), jnp.float32)
    mask3 = attention_mask.astype(jnp.float32).reshape(B, 1, S)

    x = hidden_states
    for li, params in enumerate(layer_params):
        hm = (head_mask[li] if head_mask is not None
              else jnp.ones((num_heads,), jnp.float32)).astype(jnp.float32)
        x = albert_layer(x, mask3, hm, params, num_heads=num_heads, eps=eps)
    return x


# ------------------------- pure-JAX reference ------------------------------
def albert_layer_group_reference(hidden_states, attention_mask, head_mask,
                                 layer_params, *, num_heads, eps=1e-12):
    B, S, H = hidden_states.shape
    D = H // num_heads
    x = hidden_states.astype(jnp.float32)
    mask = (attention_mask.astype(jnp.float32) if attention_mask is not None
            else jnp.zeros((B, S), jnp.float32))
    for li, p in enumerate(layer_params):
        (wq, bq, wk, bk, wv, bv, wd, bd,
         g1, be1, w1, bb1, w2, bb2, g2, be2) = p
        q = x @ wq + bq
        k = x @ wk + bk
        v = x @ wv + bv

        def split(t):
            return t.reshape(B, S, num_heads, D).transpose(0, 2, 1, 3)

        qh, kh, vh = split(q), split(k), split(v)
        scores = jnp.einsum('bhqd,bhkd->bhqk', qh, kh) / math.sqrt(D)
        scores = scores + mask[:, None, None, :]
        probs = jax.nn.softmax(scores, axis=-1)
        hm = (head_mask[li] if head_mask is not None
              else jnp.ones((num_heads,), jnp.float32))
        probs = probs * hm[None, :, None, None]
        ctx = jnp.einsum('bhqk,bhkd->bhqd', probs, vh)
        ctx = ctx.transpose(0, 2, 1, 3).reshape(B, S, H)
        proj = ctx @ wd + bd
        attn_out = _layer_norm(x + proj, g1, be1, eps)
        f = _gelu_new(attn_out @ w1 + bb1) @ w2 + bb2
        x = _layer_norm(f + attn_out, g2, be2, eps)
    return x


if __name__ == "__main__":
    # Small synthetic ALBERT config.
    B, S = 2, 8
    H, NH, I = 32, 4, 64          # hidden, heads (head dim 8), intermediate
    inner_group_num = 2
    layer_norm_eps = 1e-12

    key = jax.random.PRNGKey(0)

    def make_layer_params(k):
        ks = jax.random.split(k, 12)

        def w(kk, shp):
            return 0.1 * jax.random.normal(kk, shp, jnp.float32)

        wq = w(ks[0], (H, H)); bq = w(ks[1], (1, H))
        wk = w(ks[2], (H, H)); bk = w(ks[3], (1, H))
        wv = w(ks[4], (H, H)); bv = w(ks[5], (1, H))
        wd = w(ks[6], (H, H)); bd = w(ks[7], (1, H))
        g1 = jnp.ones((1, H), jnp.float32); be1 = jnp.zeros((1, H), jnp.float32)
        w1 = w(ks[8], (H, I)); bb1 = w(ks[9], (1, I))
        w2 = w(ks[10], (I, H)); bb2 = w(ks[11], (1, H))
        g2 = jnp.ones((1, H), jnp.float32); be2 = jnp.zeros((1, H), jnp.float32)
        return (wq, bq, wk, bk, wv, bv, wd, bd,
                g1, be1, w1, bb1, w2, bb2, g2, be2)

    key, *lkeys = jax.random.split(key, inner_group_num + 1)
    layer_params = [make_layer_params(k) for k in lkeys]

    key, kx = jax.random.split(key)
    hidden_states = jax.random.normal(kx, (B, S, H), jnp.float32)

    # Additive attention mask (HF-style extended mask values): mask the last two
    # tokens of the second sequence.
    attention_mask = jnp.zeros((B, S), jnp.float32).at[1, 6:].set(-10000.0)
    # Per-layer head mask; zero out one head in the second layer.
    head_mask = jnp.ones((inner_group_num, NH), jnp.float32).at[1, 2].set(0.0)

    out = albert_layer_group(hidden_states, attention_mask, head_mask,
                             layer_params, num_heads=NH, eps=layer_norm_eps)
    out = jax.block_until_ready(out)

    ref = albert_layer_group_reference(hidden_states, attention_mask, head_mask,
                                       layer_params, num_heads=NH,
                                       eps=layer_norm_eps)

    assert out.shape == (B, S, H)
    max_err = float(jnp.max(jnp.abs(out - ref)))
    assert jnp.allclose(out, ref, atol=3e-2, rtol=3e-2), max_err

    print("KERNEL_OK")
</pallas_src>

<mosaic_0001>
module attributes {stable_mosaic.version = 11 : i64} {
  func.func @albert_layer_kernel(%arg0: i32, %arg1: memref<1x8x32xf32, #tpu.memory_space<vmem>>, %arg2: memref<1x1x8xf32, #tpu.memory_space<vmem>>, %arg3: memref<4xf32, #tpu.memory_space<smem>>, %arg4: memref<32x32xf32, #tpu.memory_space<vmem>>, %arg5: memref<1x32xf32, #tpu.memory_space<vmem>>, %arg6: memref<32x32xf32, #tpu.memory_space<vmem>>, %arg7: memref<1x32xf32, #tpu.memory_space<vmem>>, %arg8: memref<32x32xf32, #tpu.memory_space<vmem>>, %arg9: memref<1x32xf32, #tpu.memory_space<vmem>>, %arg10: memref<32x32xf32, #tpu.memory_space<vmem>>, %arg11: memref<1x32xf32, #tpu.memory_space<vmem>>, %arg12: memref<1x32xf32, #tpu.memory_space<vmem>>, %arg13: memref<1x32xf32, #tpu.memory_space<vmem>>, %arg14: memref<32x64xf32, #tpu.memory_space<vmem>>, %arg15: memref<1x64xf32, #tpu.memory_space<vmem>>, %arg16: memref<64x32xf32, #tpu.memory_space<vmem>>, %arg17: memref<1x32xf32, #tpu.memory_space<vmem>>, %arg18: memref<1x32xf32, #tpu.memory_space<vmem>>, %arg19: memref<1x32xf32, #tpu.memory_space<vmem>>, %arg20: memref<1x8x32xf32, #tpu.memory_space<vmem>>) attributes {dimension_semantics = [#tpu.dimension_semantics<parallel>], iteration_bounds = array<i64: 2>, scalar_prefetch = 0 : i64, scratch_operands = 0 : i64, tpu.core_type = #tpu.core_type<tc>, window_params = [{transform_indices = @transform_0, window_bounds = array<i64: 1, 8, 32>}, {transform_indices = @transform_1, window_bounds = array<i64: 1, 1, 8>}, {transform_indices = @transform_2, window_bounds = array<i64: 4>}, {pipeline_mode = #tpu.pipeline_mode<synchronous>, transform_indices = @transform_3, window_bounds = array<i64: 32, 32>}, {pipeline_mode = #tpu.pipeline_mode<synchronous>, transform_indices = @transform_4, window_bounds = array<i64: 1, 32>}, {pipeline_mode = #tpu.pipeline_mode<synchronous>, transform_indices = @transform_5, window_bounds = array<i64: 32, 32>}, {pipeline_mode = #tpu.pipeline_mode<synchronous>, transform_indices = @transform_6, window_bounds = array<i64: 1, 32>}, {pipeline_mode = #tpu.pipeline_mode<synchronous>, transform_indices = @transform_7, window_bounds = array<i64: 32, 32>}, {pipeline_mode = #tpu.pipeline_mode<synchronous>, transform_indices = @transform_8, window_bounds = array<i64: 1, 32>}, {pipeline_mode = #tpu.pipeline_mode<synchronous>, transform_indices = @transform_9, window_bounds = array<i64: 32, 32>}, {pipeline_mode = #tpu.pipeline_mode<synchronous>, transform_indices = @transform_10, window_bounds = array<i64: 1, 32>}, {pipeline_mode = #tpu.pipeline_mode<synchronous>, transform_indices = @transform_11, window_bounds = array<i64: 1, 32>}, {pipeline_mode = #tpu.pipeline_mode<synchronous>, transform_indices = @transform_12, window_bounds = array<i64: 1, 32>}, {pipeline_mode = #tpu.pipeline_mode<synchronous>, transform_indices = @transform_13, window_bounds = array<i64: 32, 64>}, {pipeline_mode = #tpu.pipeline_mode<synchronous>, transform_indices = @transform_14, window_bounds = array<i64: 1, 64>}, {pipeline_mode = #tpu.pipeline_mode<synchronous>, transform_indices = @transform_15, window_bounds = array<i64: 64, 32>}, {pipeline_mode = #tpu.pipeline_mode<synchronous>, transform_indices = @transform_16, window_bounds = array<i64: 1, 32>}, {pipeline_mode = #tpu.pipeline_mode<synchronous>, transform_indices = @transform_17, window_bounds = array<i64: 1, 32>}, {pipeline_mode = #tpu.pipeline_mode<synchronous>, transform_indices = @transform_18, window_bounds = array<i64: 1, 32>}, {transform_indices = @transform_19, window_bounds = array<i64: 1, 8, 32>}]} {
    %c0 = arith.constant 0 : index
    %c0_0 = arith.constant 0 : index
    %c0_1 = arith.constant 0 : index
    %0 = vector.load %arg1[%c0, %c0_0, %c0_1] : memref<1x8x32xf32, #tpu.memory_space<vmem>>, vector<1x8x32xf32>
    %1 = vector.shape_cast %0 : vector<1x8x32xf32> to vector<8x32xf32>
    %c0_2 = arith.constant 0 : index
    %c0_3 = arith.constant 0 : index
    %c0_4 = arith.constant 0 : index
    %2 = vector.load %arg2[%c0_2, %c0_3, %c0_4] : memref<1x1x8xf32, #tpu.memory_space<vmem>>, vector<1x1x8xf32>
    %3 = vector.shape_cast %2 : vector<1x1x8xf32> to vector<1x8xf32>
    %c0_5 = arith.constant 0 : index
    %c0_6 = arith.constant 0 : index
    %4 = vector.load %arg4[%c0_5, %c0_6] : memref<32x32xf32, #tpu.memory_space<vmem>>, vector<32x32xf32>
    %cst = arith.constant dense<0.000000e+00> : vector<8x32xf32>
    %5 = tpu.matmul %1, %4, %cst {dimension_numbers = #tpu.dot_dimension_numbers<[1], [0], [0], [1], [0, 0, 1, 1], [], []>} : vector<8x32xf32>, vector<32x32xf32>, vector<8x32xf32> -> vector<8x32xf32>
    %c0_7 = arith.constant 0 : index
    %c0_8 = arith.constant 0 : index
    %6 = vector.load %arg5[%c0_7, %c0_8] : memref<1x32xf32, #tpu.memory_space<vmem>>, vector<1x32xf32>
    %7 = vector.broadcast %6 : vector<1x32xf32> to vector<8x32xf32>
    %8 = arith.addf %5, %7 : vector<8x32xf32>
    %c0_9 = arith.constant 0 : index
    %c0_10 = arith.constant 0 : index
    %9 = vector.load %arg6[%c0_9, %c0_10] : memref<32x32xf32, #tpu.memory_space<vmem>>, vector<32x32xf32>
    %cst_11 = arith.constant dense<0.000000e+00> : vector<8x32xf32>
    %10 = tpu.matmul %1, %9, %cst_11 {dimension_numbers = #tpu.dot_dimension_numbers<[1], [0], [0], [1], [0, 0, 1, 1], [], []>} : vector<8x32xf32>, vector<32x32xf32>, vector<8x32xf32> -> vector<8x32xf32>
    %c0_12 = arith.constant 0 : index
    %c0_13 = arith.constant 0 : index
    %11 = vector.load %arg7[%c0_12, %c0_13] : memref<1x32xf32, #tpu.memory_space<vmem>>, vector<1x32xf32>
    %12 = vector.broadcast %11 : vector<1x32xf32> to vector<8x32xf32>
    %13 = arith.addf %10, %12 : vector<8x32xf32>
    %c0_14 = arith.constant 0 : index
    %c0_15 = arith.constant 0 : index
    %14 = vector.load %arg8[%c0_14, %c0_15] : memref<32x32xf32, #tpu.memory_space<vmem>>, vector<32x32xf32>
    %cst_16 = arith.constant dense<0.000000e+00> : vector<8x32xf32>
    %15 = tpu.matmul %1, %14, %cst_16 {dimension_numbers = #tpu.dot_dimension_numbers<[1], [0], [0], [1], [0, 0, 1, 1], [], []>} : vector<8x32xf32>, vector<32x32xf32>, vector<8x32xf32> -> vector<8x32xf32>
    %c0_17 = arith.constant 0 : index
    %c0_18 = arith.constant 0 : index
    %16 = vector.load %arg9[%c0_17, %c0_18] : memref<1x32xf32, #tpu.memory_space<vmem>>, vector<1x32xf32>
    %17 = vector.broadcast %16 : vector<1x32xf32> to vector<8x32xf32>
    %18 = arith.addf %15, %17 : vector<8x32xf32>
    %cst_19 = arith.constant 0.000000e+00 : f32
    %19 = vector.broadcast %cst_19 : f32 to vector<8x32xf32>
    %20 = vector.extract_strided_slice %8 {offsets = [0, 0], sizes = [8, 8], strides = [1, 1]} : vector<8x32xf32> to vector<8x8xf32>
    %21 = vector.extract_strided_slice %13 {offsets = [0, 0], sizes = [8, 8], strides = [1, 1]} : vector<8x32xf32> to vector<8x8xf32>
    %22 = vector.extract_strided_slice %18 {offsets = [0, 0], sizes = [8, 8], strides = [1, 1]} : vector<8x32xf32> to vector<8x8xf32>
    %cst_20 = arith.constant dense<0.000000e+00> : vector<8x8xf32>
    %23 = tpu.matmul %20, %21, %cst_20 {dimension_numbers = #tpu.dot_dimension_numbers<[1], [1], [0], [0], [0, 0, 1, 0], [], []>} : vector<8x8xf32>, vector<8x8xf32>, vector<8x8xf32> -> vector<8x8xf32>
    %cst_21 = arith.constant 0.353553385 : f32
    %24 = vector.broadcast %cst_21 : f32 to vector<8x8xf32>
    %25 = arith.mulf %23, %24 : vector<8x8xf32>
    %26 = vector.broadcast %3 : vector<1x8xf32> to vector<8x8xf32>
    %27 = arith.addf %25, %26 : vector<8x8xf32>
    %cst_22 = arith.constant dense<0xFF800000> : vector<8xf32>
    %28 = vector.multi_reduction <maximumf>, %27, %cst_22 [1] : vector<8x8xf32> to vector<8xf32>
    %29 = vector.shape_cast %28 : vector<8xf32> to vector<8x1xf32>
    %30 = vector.broadcast %29 : vector<8x1xf32> to vector<8x8xf32>
    %31 = arith.subf %27, %30 : vector<8x8xf32>
    %32 = math.exp %31 : vector<8x8xf32>
    %cst_23 = arith.constant dense<0.000000e+00> : vector<8xf32>
    %33 = vector.multi_reduction <add>, %32, %cst_23 [1] : vector<8x8xf32> to vector<8xf32>
    %34 = vector.shape_cast %33 : vector<8xf32> to vector<8x1xf32>
    %35 = vector.broadcast %34 : vector<8x1xf32> to vector<8x8xf32>
    %36 = arith.divf %32, %35 : vector<8x8xf32>
    %c0_24 = arith.constant 0 : index
    %37 = memref.load %arg3[%c0_24] : memref<4xf32, #tpu.memory_space<smem>>
    %cst_25 = arith.constant dense<0.000000e+00> : vector<8x8xf32>
    %38 = tpu.matmul %36, %22, %cst_25 {dimension_numbers = #tpu.dot_dimension_numbers<[1], [0], [0], [1], [0, 0, 1, 1], [], []>} : vector<8x8xf32>, vector<8x8xf32>, vector<8x8xf32> -> vector<8x8xf32>
    %39 = vector.broadcast %37 : f32 to vector<8x8xf32>
    %40 = arith.mulf %38, %39 : vector<8x8xf32>
    %c0_26 = arith.constant 0 : index
    %c0_27 = arith.constant 0 : index
    %41 = vector.load %arg10[%c0_26, %c0_27] : memref<32x32xf32, #tpu.memory_space<vmem>>, vector<8x32xf32>
    %cst_28 = arith.constant dense<0.000000e+00> : vector<8x32xf32>
    %42 = tpu.matmul %40, %41, %cst_28 {dimension_numbers = #tpu.dot_dimension_numbers<[1], [0], [0], [1], [0, 0, 1, 1], [], []>} : vector<8x8xf32>, vector<8x32xf32>, vector<8x32xf32> -> vector<8x32xf32>
    %43 = arith.addf %19, %42 : vector<8x32xf32>
    %44 = vector.extract_strided_slice %8 {offsets = [0, 8], sizes = [8, 8], strides = [1, 1]} : vector<8x32xf32> to vector<8x8xf32>
    %45 = vector.extract_strided_slice %13 {offsets = [0, 8], sizes = [8, 8], strides = [1, 1]} : vector<8x32xf32> to vector<8x8xf32>
    %46 = vector.extract_strided_slice %18 {offsets = [0, 8], sizes = [8, 8], strides = [1, 1]} : vector<8x32xf32> to vector<8x8xf32>
    %cst_29 = arith.constant dense<0.000000e+00> : vector<8x8xf32>
    %47 = tpu.matmul %44, %45, %cst_29 {dimension_numbers = #tpu.dot_dimension_numbers<[1], [1], [0], [0], [0, 0, 1, 0], [], []>} : vector<8x8xf32>, vector<8x8xf32>, vector<8x8xf32> -> vector<8x8xf32>
    %cst_30 = arith.constant 0.353553385 : f32
    %48 = vector.broadcast %cst_30 : f32 to vector<8x8xf32>
    %49 = arith.mulf %47, %48 : vector<8x8xf32>
    %50 = vector.broadcast %3 : vector<1x8xf32> to vector<8x8xf32>
    %51 = arith.addf %49, %50 : vector<8x8xf32>
    %cst_31 = arith.constant dense<0xFF800000> : vector<8xf32>
    %52 = vector.multi_reduction <maximumf>, %51, %cst_31 [1] : vector<8x8xf32> to vector<8xf32>
    %53 = vector.shape_cast %52 : vector<8xf32> to vector<8x1xf32>
    %54 = vector.broadcast %53 : vector<8x1xf32> to vector<8x8xf32>
    %55 = arith.subf %51, %54 : vector<8x8xf32>
    %56 = math.exp %55 : vector<8x8xf32>
    %cst_32 = arith.constant dense<0.000000e+00> : vector<8xf32>
    %57 = vector.multi_reduction <add>, %56, %cst_32 [1] : vector<8x8xf32> to vector<8xf32>
    %58 = vector.shape_cast %57 : vector<8xf32> to vector<8x1xf32>
    %59 = vector.broadcast %58 : vector<8x1xf32> to vector<8x8xf32>
    %60 = arith.divf %56, %59 : vector<8x8xf32>
    %c1 = arith.constant 1 : index
    %61 = memref.load %arg3[%c1] : memref<4xf32, #tpu.memory_space<smem>>
    %cst_33 = arith.constant dense<0.000000e+00> : vector<8x8xf32>
    %62 = tpu.matmul %60, %46, %cst_33 {dimension_numbers = #tpu.dot_dimension_numbers<[1], [0], [0], [1], [0, 0, 1, 1], [], []>} : vector<8x8xf32>, vector<8x8xf32>, vector<8x8xf32> -> vector<8x8xf32>
    %63 = vector.broadcast %61 : f32 to vector<8x8xf32>
    %64 = arith.mulf %62, %63 : vector<8x8xf32>
    %c8 = arith.constant 8 : index
    %c0_34 = arith.constant 0 : index
    %65 = vector.load %arg10[%c8, %c0_34] : memref<32x32xf32, #tpu.memory_space<vmem>>, vector<8x32xf32>
    %cst_35 = arith.constant dense<0.000000e+00> : vector<8x32xf32>
    %66 = tpu.matmul %64, %65, %cst_35 {dimension_numbers = #tpu.dot_dimension_numbers<[1], [0], [0], [1], [0, 0, 1, 1], [], []>} : vector<8x8xf32>, vector<8x32xf32>, vector<8x32xf32> -> vector<8x32xf32>
    %67 = arith.addf %43, %66 : vector<8x32xf32>
    %68 = vector.extract_strided_slice %8 {offsets = [0, 16], sizes = [8, 8], strides = [1, 1]} : vector<8x32xf32> to vector<8x8xf32>
    %69 = vector.extract_strided_slice %13 {offsets = [0, 16], sizes = [8, 8], strides = [1, 1]} : vector<8x32xf32> to vector<8x8xf32>
    %70 = vector.extract_strided_slice %18 {offsets = [0, 16], sizes = [8, 8], strides = [1, 1]} : vector<8x32xf32> to vector<8x8xf32>
    %cst_36 = arith.constant dense<0.000000e+00> : vector<8x8xf32>
    %71 = tpu.matmul %68, %69, %cst_36 {dimension_numbers = #tpu.dot_dimension_numbers<[1], [1], [0], [0], [0, 0, 1, 0], [], []>} : vector<8x8xf32>, vector<8x8xf32>, vector<8x8xf32> -> vector<8x8xf32>
    %cst_37 = arith.constant 0.353553385 : f32
    %72 = vector.broadcast %cst_37 : f32 to vector<8x8xf32>
    %73 = arith.mulf %71, %72 : vector<8x8xf32>
    %74 = vector.broadcast %3 : vector<1x8xf32> to vector<8x8xf32>
    %75 = arith.addf %73, %74 : vector<8x8xf32>
    %cst_38 = arith.constant dense<0xFF800000> : vector<8xf32>
    %76 = vector.multi_reduction <maximumf>, %75, %cst_38 [1] : vector<8x8xf32> to vector<8xf32>
    %77 = vector.shape_cast %76 : vector<8xf32> to vector<8x1xf32>
    %78 = vector.broadcast %77 : vector<8x1xf32> to vector<8x8xf32>
    %79 = arith.subf %75, %78 : vector<8x8xf32>
    %80 = math.exp %79 : vector<8x8xf32>
    %cst_39 = arith.constant dense<0.000000e+00> : vector<8xf32>
    %81 = vector.multi_reduction <add>, %80, %cst_39 [1] : vector<8x8xf32> to vector<8xf32>
    %82 = vector.shape_cast %81 : vector<8xf32> to vector<8x1xf32>
    %83 = vector.broadcast %82 : vector<8x1xf32> to vector<8x8xf32>
    %84 = arith.divf %80, %83 : vector<8x8xf32>
    %c2 = arith.constant 2 : index
    %85 = memref.load %arg3[%c2] : memref<4xf32, #tpu.memory_space<smem>>
    %cst_40 = arith.constant dense<0.000000e+00> : vector<8x8xf32>
    %86 = tpu.matmul %84, %70, %cst_40 {dimension_numbers = #tpu.dot_dimension_numbers<[1], [0], [0], [1], [0, 0, 1, 1], [], []>} : vector<8x8xf32>, vector<8x8xf32>, vector<8x8xf32> -> vector<8x8xf32>
    %87 = vector.broadcast %85 : f32 to vector<8x8xf32>
    %88 = arith.mulf %86, %87 : vector<8x8xf32>
    %c16 = arith.constant 16 : index
    %c0_41 = arith.constant 0 : index
    %89 = vector.load %arg10[%c16, %c0_41] : memref<32x32xf32, #tpu.memory_space<vmem>>, vector<8x32xf32>
    %cst_42 = arith.constant dense<0.000000e+00> : vector<8x32xf32>
    %90 = tpu.matmul %88, %89, %cst_42 {dimension_numbers = #tpu.dot_dimension_numbers<[1], [0], [0], [1], [0, 0, 1, 1], [], []>} : vector<8x8xf32>, vector<8x32xf32>, vector<8x32xf32> -> vector<8x32xf32>
    %91 = arith.addf %67, %90 : vector<8x32xf32>
    %92 = vector.extract_strided_slice %8 {offsets = [0, 24], sizes = [8, 8], strides = [1, 1]} : vector<8x32xf32> to vector<8x8xf32>
    %93 = vector.extract_strided_slice %13 {offsets = [0, 24], sizes = [8, 8], strides = [1, 1]} : vector<8x32xf32> to vector<8x8xf32>
    %94 = vector.extract_strided_slice %18 {offsets = [0, 24], sizes = [8, 8], strides = [1, 1]} : vector<8x32xf32> to vector<8x8xf32>
    %cst_43 = arith.constant dense<0.000000e+00> : vector<8x8xf32>
    %95 = tpu.matmul %92, %93, %cst_43 {dimension_numbers = #tpu.dot_dimension_numbers<[1], [1], [0], [0], [0, 0, 1, 0], [], []>} : vector<8x8xf32>, vector<8x8xf32>, vector<8x8xf32> -> vector<8x8xf32>
    %cst_44 = arith.constant 0.353553385 : f32
    %96 = vector.broadcast %cst_44 : f32 to vector<8x8xf32>
    %97 = arith.mulf %95, %96 : vector<8x8xf32>
    %98 = vector.broadcast %3 : vector<1x8xf32> to vector<8x8xf32>
    %99 = arith.addf %97, %98 : vector<8x8xf32>
    %cst_45 = arith.constant dense<0xFF800000> : vector<8xf32>
    %100 = vector.multi_reduction <maximumf>, %99, %cst_45 [1] : vector<8x8xf32> to vector<8xf32>
    %101 = vector.shape_cast %100 : vector<8xf32> to vector<8x1xf32>
    %102 = vector.broadcast %101 : vector<8x1xf32> to vector<8x8xf32>
    %103 = arith.subf %99, %102 : vector<8x8xf32>
    %104 = math.exp %103 : vector<8x8xf32>
    %cst_46 = arith.constant dense<0.000000e+00> : vector<8xf32>
    %105 = vector.multi_reduction <add>, %104, %cst_46 [1] : vector<8x8xf32> to vector<8xf32>
    %106 = vector.shape_cast %105 : vector<8xf32> to vector<8x1xf32>
    %107 = vector.broadcast %106 : vector<8x1xf32> to vector<8x8xf32>
    %108 = arith.divf %104, %107 : vector<8x8xf32>
    %c3 = arith.constant 3 : index
    %109 = memref.load %arg3[%c3] : memref<4xf32, #tpu.memory_space<smem>>
    %cst_47 = arith.constant dense<0.000000e+00> : vector<8x8xf32>
    %110 = tpu.matmul %108, %94, %cst_47 {dimension_numbers = #tpu.dot_dimension_numbers<[1], [0], [0], [1], [0, 0, 1, 1], [], []>} : vector<8x8xf32>, vector<8x8xf32>, vector<8x8xf32> -> vector<8x8xf32>
    %111 = vector.broadcast %109 : f32 to vector<8x8xf32>
    %112 = arith.mulf %110, %111 : vector<8x8xf32>
    %c24 = arith.constant 24 : index
    %c0_48 = arith.constant 0 : index
    %113 = vector.load %arg10[%c24, %c0_48] : memref<32x32xf32, #tpu.memory_space<vmem>>, vector<8x32xf32>
    %cst_49 = arith.constant dense<0.000000e+00> : vector<8x32xf32>
    %114 = tpu.matmul %112, %113, %cst_49 {dimension_numbers = #tpu.dot_dimension_numbers<[1], [0], [0], [1], [0, 0, 1, 1], [], []>} : vector<8x8xf32>, vector<8x32xf32>, vector<8x32xf32> -> vector<8x32xf32>
    %115 = arith.addf %91, %114 : vector<8x32xf32>
    %c0_50 = arith.constant 0 : index
    %c0_51 = arith.constant 0 : index
    %116 = vector.load %arg11[%c0_50, %c0_51] : memref<1x32xf32, #tpu.memory_space<vmem>>, vector<1x32xf32>
    %117 = vector.broadcast %116 : vector<1x32xf32> to vector<8x32xf32>
    %118 = arith.addf %115, %117 : vector<8x32xf32>
    %119 = arith.addf %1, %118 : vector<8x32xf32>
    %c0_52 = arith.constant 0 : index
    %c0_53 = arith.constant 0 : index
    %120 = vector.load %arg12[%c0_52, %c0_53] : memref<1x32xf32, #tpu.memory_space<vmem>>, vector<1x32xf32>
    %c0_54 = arith.constant 0 : index
    %c0_55 = arith.constant 0 : index
    %121 = vector.load %arg13[%c0_54, %c0_55] : memref<1x32xf32, #tpu.memory_space<vmem>>, vector<1x32xf32>
    %cst_56 = arith.constant dense<0.000000e+00> : vector<8xf32>
    %122 = vector.multi_reduction <add>, %119, %cst_56 [1] : vector<8x32xf32> to vector<8xf32>
    %123 = vector.shape_cast %122 : vector<8xf32> to vector<8x1xf32>
    %cst_57 = arith.constant 3.200000e+01 : f32
    %124 = vector.broadcast %cst_57 : f32 to vector<8x1xf32>
    %125 = arith.divf %123, %124 : vector<8x1xf32>
    %126 = vector.broadcast %125 : vector<8x1xf32> to vector<8x32xf32>
    %127 = arith.subf %119, %126 : vector<8x32xf32>
    %128 = arith.mulf %127, %127 : vector<8x32xf32>
    %cst_58 = arith.constant dense<0.000000e+00> : vector<8xf32>
    %129 = vector.multi_reduction <add>, %128, %cst_58 [1] : vector<8x32xf32> to vector<8xf32>
    %130 = vector.shape_cast %129 : vector<8xf32> to vector<8x1xf32>
    %cst_59 = arith.constant 3.200000e+01 : f32
    %131 = vector.broadcast %cst_59 : f32 to vector<8x1xf32>
    %132 = arith.divf %130, %131 : vector<8x1xf32>
    %133 = vector.broadcast %125 : vector<8x1xf32> to vector<8x32xf32>
    %134 = arith.subf %119, %133 : vector<8x32xf32>
    %cst_60 = arith.constant 9.99999996E-13 : f32
    %135 = vector.broadcast %cst_60 : f32 to vector<8x1xf32>
    %136 = arith.addf %132, %135 : vector<8x1xf32>
    %137 = math.rsqrt %136 : vector<8x1xf32>
    %138 = vector.broadcast %137 : vector<8x1xf32> to vector<8x32xf32>
    %139 = arith.mulf %134, %138 : vector<8x32xf32>
    %140 = vector.broadcast %120 : vector<1x32xf32> to vector<8x32xf32>
    %141 = arith.mulf %139, %140 : vector<8x32xf32>
    %142 = vector.broadcast %121 : vector<1x32xf32> to vector<8x32xf32>
    %143 = arith.addf %141, %142 : vector<8x32xf32>
    %c0_61 = arith.constant 0 : index
    %c0_62 = arith.constant 0 : index
    %144 = vector.load %arg14[%c0_61, %c0_62] : memref<32x64xf32, #tpu.memory_space<vmem>>, vector<32x64xf32>
    %cst_63 = arith.constant dense<0.000000e+00> : vector<8x64xf32>
    %145 = tpu.matmul %143, %144, %cst_63 {dimension_numbers = #tpu.dot_dimension_numbers<[1], [0], [0], [1], [0, 0, 1, 1], [], []>} : vector<8x32xf32>, vector<32x64xf32>, vector<8x64xf32> -> vector<8x64xf32>
    %c0_64 = arith.constant 0 : index
    %c0_65 = arith.constant 0 : index
    %146 = vector.load %arg15[%c0_64, %c0_65] : memref<1x64xf32, #tpu.memory_space<vmem>>, vector<1x64xf32>
    %147 = vector.broadcast %146 : vector<1x64xf32> to vector<8x64xf32>
    %148 = arith.addf %145, %147 : vector<8x64xf32>
    %cst_66 = arith.constant 5.000000e-01 : f32
    %149 = vector.broadcast %cst_66 : f32 to vector<8x64xf32>
    %150 = arith.mulf %149, %148 : vector<8x64xf32>
    %cst_67 = arith.constant 4.471500e-02 : f32
    %151 = vector.broadcast %cst_67 : f32 to vector<8x64xf32>
    %152 = arith.mulf %151, %148 : vector<8x64xf32>
    %153 = arith.mulf %152, %148 : vector<8x64xf32>
    %154 = arith.mulf %153, %148 : vector<8x64xf32>
    %155 = arith.addf %148, %154 : vector<8x64xf32>
    %cst_68 = arith.constant 0.797884583 : f32
    %156 = vector.broadcast %cst_68 : f32 to vector<8x64xf32>
    %157 = arith.mulf %156, %155 : vector<8x64xf32>
    %158 = math.tanh %157 : vector<8x64xf32>
    %cst_69 = arith.constant 1.000000e+00 : f32
    %159 = vector.broadcast %cst_69 : f32 to vector<8x64xf32>
    %160 = arith.addf %159, %158 : vector<8x64xf32>
    %161 = arith.mulf %150, %160 : vector<8x64xf32>
    %c0_70 = arith.constant 0 : index
    %c0_71 = arith.constant 0 : index
    %162 = vector.load %arg16[%c0_70, %c0_71] : memref<64x32xf32, #tpu.memory_space<vmem>>, vector<64x32xf32>
    %cst_72 = arith.constant dense<0.000000e+00> : vector<8x32xf32>
    %163 = tpu.matmul %161, %162, %cst_72 {dimension_numbers = #tpu.dot_dimension_numbers<[1], [0], [0], [1], [0, 0, 1, 1], [], []>} : vector<8x64xf32>, vector<64x32xf32>, vector<8x32xf32> -> vector<8x32xf32>
    %c0_73 = arith.constant 0 : index
    %c0_74 = arith.constant 0 : index
    %164 = vector.load %arg17[%c0_73, %c0_74] : memref<1x32xf32, #tpu.memory_space<vmem>>, vector<1x32xf32>
    %165 = vector.broadcast %164 : vector<1x32xf32> to vector<8x32xf32>
    %166 = arith.addf %163, %165 : vector<8x32xf32>
    %167 = arith.addf %166, %143 : vector<8x32xf32>
    %c0_75 = arith.constant 0 : index
    %c0_76 = arith.constant 0 : index
    %168 = vector.load %arg18[%c0_75, %c0_76] : memref<1x32xf32, #tpu.memory_space<vmem>>, vector<1x32xf32>
    %c0_77 = arith.constant 0 : index
    %c0_78 = arith.constant 0 : index
    %169 = vector.load %arg19[%c0_77, %c0_78] : memref<1x32xf32, #tpu.memory_space<vmem>>, vector<1x32xf32>
    %cst_79 = arith.constant dense<0.000000e+00> : vector<8xf32>
    %170 = vector.multi_reduction <add>, %167, %cst_79 [1] : vector<8x32xf32> to vector<8xf32>
    %171 = vector.shape_cast %170 : vector<8xf32> to vector<8x1xf32>
    %cst_80 = arith.constant 3.200000e+01 : f32
    %172 = vector.broadcast %cst_80 : f32 to vector<8x1xf32>
    %173 = arith.divf %171, %172 : vector<8x1xf32>
    %174 = vector.broadcast %173 : vector<8x1xf32> to vector<8x32xf32>
    %175 = arith.subf %167, %174 : vector<8x32xf32>
    %176 = arith.mulf %175, %175 : vector<8x32xf32>
    %cst_81 = arith.constant dense<0.000000e+00> : vector<8xf32>
    %177 = vector.multi_reduction <add>, %176, %cst_81 [1] : vector<8x32xf32> to vector<8xf32>
    %178 = vector.shape_cast %177 : vector<8xf32> to vector<8x1xf32>
    %cst_82 = arith.constant 3.200000e+01 : f32
    %179 = vector.broadcast %cst_82 : f32 to vector<8x1xf32>
    %180 = arith.divf %178, %179 : vector<8x1xf32>
    %181 = vector.broadcast %173 : vector<8x1xf32> to vector<8x32xf32>
    %182 = arith.subf %167, %181 : vector<8x32xf32>
    %cst_83 = arith.constant 9.99999996E-13 : f32
    %183 = vector.broadcast %cst_83 : f32 to vector<8x1xf32>
    %184 = arith.addf %180, %183 : vector<8x1xf32>
    %185 = math.rsqrt %184 : vector<8x1xf32>
    %186 = vector.broadcast %185 : vector<8x1xf32> to vector<8x32xf32>
    %187 = arith.mulf %182, %186 : vector<8x32xf32>
    %188 = vector.broadcast %168 : vector<1x32xf32> to vector<8x32xf32>
    %189 = arith.mulf %187, %188 : vector<8x32xf32>
    %190 = vector.broadcast %169 : vector<1x32xf32> to vector<8x32xf32>
    %191 = arith.addf %189, %190 : vector<8x32xf32>
    %c0_84 = arith.constant 0 : index
    %c0_85 = arith.constant 0 : index
    %c0_86 = arith.constant 0 : index
    %192 = vector.load %arg20[%c0_84, %c0_85, %c0_86] : memref<1x8x32xf32, #tpu.memory_space<vmem>>, vector<1x8x32xf32>
    %193 = vector.shape_cast %192 : vector<1x8x32xf32> to vector<8x32xf32>
    %194 = vector.shape_cast %191 : vector<8x32xf32> to vector<1x8x32xf32>
    tpu.vector_store %arg20[%c0_84, %c0_85, %c0_86], %194 {strides = array<i32>} : memref<1x8x32xf32, #tpu.memory_space<vmem>>, vector<1x8x32xf32>,
    return
  }
  func.func @transform_0(%arg0: i32) -> (i32, i32, i32) {
    %c0_i32 = arith.constant 0 : i32
    %c0_i32_0 = arith.constant 0 : i32
    %c0_i32_1 = arith.constant 0 : i32
    return %arg0, %c0_i32, %c0_i32_0 : i32, i32, i32
  }
  func.func @transform_1(%arg0: i32) -> (i32, i32, i32) {
    %c0_i32 = arith.constant 0 : i32
    %c0_i32_0 = arith.constant 0 : i32
    %c0_i32_1 = arith.constant 0 : i32
    return %arg0, %c0_i32, %c0_i32_0 : i32, i32, i32
  }
  func.func @transform_2(%arg0: i32) -> i32 {
    %c0_i32 = arith.constant 0 : i32
    %c0_i32_0 = arith.constant 0 : i32
    return %c0_i32 : i32
  }
  func.func @transform_3(%arg0: i32) -> (i32, i32) {
    %c0_i32 = arith.constant 0 : i32
    %c0_i32_0 = arith.constant 0 : i32
    %c0_i32_1 = arith.constant 0 : i32
    return %c0_i32, %c0_i32_0 : i32, i32
  }
  func.func @transform_4(%arg0: i32) -> (i32, i32) {
    %c0_i32 = arith.constant 0 : i32
    %c0_i32_0 = arith.constant 0 : i32
    %c0_i32_1 = arith.constant 0 : i32
    return %c0_i32, %c0_i32_0 : i32, i32
  }
  func.func @transform_5(%arg0: i32) -> (i32, i32) {
    %c0_i32 = arith.constant 0 : i32
    %c0_i32_0 = arith.constant 0 : i32
    %c0_i32_1 = arith.constant 0 : i32
    return %c0_i32, %c0_i32_0 : i32, i32
  }
  func.func @transform_6(%arg0: i32) -> (i32, i32) {
    %c0_i32 = arith.constant 0 : i32
    %c0_i32_0 = arith.constant 0 : i32
    %c0_i32_1 = arith.constant 0 : i32
    return %c0_i32, %c0_i32_0 : i32, i32
  }
  func.func @transform_7(%arg0: i32) -> (i32, i32) {
    %c0_i32 = arith.constant 0 : i32
    %c0_i32_0 = arith.constant 0 : i32
    %c0_i32_1 = arith.constant 0 : i32
    return %c0_i32, %c0_i32_0 : i32, i32
  }
  func.func @transform_8(%arg0: i32) -> (i32, i32) {
    %c0_i32 = arith.constant 0 : i32
    %c0_i32_0 = arith.constant 0 : i32
    %c0_i32_1 = arith.constant 0 : i32
    return %c0_i32, %c0_i32_0 : i32, i32
  }
  func.func @transform_9(%arg0: i32) -> (i32, i32) {
    %c0_i32 = arith.constant 0 : i32
    %c0_i32_0 = arith.constant 0 : i32
    %c0_i32_1 = arith.constant 0 : i32
    return %c0_i32, %c0_i32_0 : i32, i32
  }
  func.func @transform_10(%arg0: i32) -> (i32, i32) {
    %c0_i32 = arith.constant 0 : i32
    %c0_i32_0 = arith.constant 0 : i32
    %c0_i32_1 = arith.constant 0 : i32
    return %c0_i32, %c0_i32_0 : i32, i32
  }
  func.func @transform_11(%arg0: i32) -> (i32, i32) {
    %c0_i32 = arith.constant 0 : i32
    %c0_i32_0 = arith.constant 0 : i32
    %c0_i32_1 = arith.constant 0 : i32
    return %c0_i32, %c0_i32_0 : i32, i32
  }
  func.func @transform_12(%arg0: i32) -> (i32, i32) {
    %c0_i32 = arith.constant 0 : i32
    %c0_i32_0 = arith.constant 0 : i32
    %c0_i32_1 = arith.constant 0 : i32
    return %c0_i32, %c0_i32_0 : i32, i32
  }
  func.func @transform_13(%arg0: i32) -> (i32, i32) {
    %c0_i32 = arith.constant 0 : i32
    %c0_i32_0 = arith.constant 0 : i32
    %c0_i32_1 = arith.constant 0 : i32
    return %c0_i32, %c0_i32_0 : i32, i32
  }
  func.func @transform_14(%arg0: i32) -> (i32, i32) {
    %c0_i32 = arith.constant 0 : i32
    %c0_i32_0 = arith.constant 0 : i32
    %c0_i32_1 = arith.constant 0 : i32
    return %c0_i32, %c0_i32_0 : i32, i32
  }
  func.func @transform_15(%arg0: i32) -> (i32, i32) {
    %c0_i32 = arith.constant 0 : i32
    %c0_i32_0 = arith.constant 0 : i32
    %c0_i32_1 = arith.constant 0 : i32
    return %c0_i32, %c0_i32_0 : i32, i32
  }
  func.func @transform_16(%arg0: i32) -> (i32, i32) {
    %c0_i32 = arith.constant 0 : i32
    %c0_i32_0 = arith.constant 0 : i32
    %c0_i32_1 = arith.constant 0 : i32
    return %c0_i32, %c0_i32_0 : i32, i32
  }
  func.func @transform_17(%arg0: i32) -> (i32, i32) {
    %c0_i32 = arith.constant 0 : i32
    %c0_i32_0 = arith.constant 0 : i32
    %c0_i32_1 = arith.constant 0 : i32
    return %c0_i32, %c0_i32_0 : i32, i32
  }
  func.func @transform_18(%arg0: i32) -> (i32, i32) {
    %c0_i32 = arith.constant 0 : i32
    %c0_i32_0 = arith.constant 0 : i32
    %c0_i32_1 = arith.constant 0 : i32
    return %c0_i32, %c0_i32_0 : i32, i32
  }
  func.func @transform_19(%arg0: i32) -> (i32, i32, i32) {
    %c0_i32 = arith.constant 0 : i32
    %c0_i32_0 = arith.constant 0 : i32
    %c0_i32_1 = arith.constant 0 : i32
    return %arg0, %c0_i32, %c0_i32_0 : i32, i32, i32
  }
}

</mosaic_0001>

<llo_original>
// kernel: tpu_custom_call.1
$region0: #{tpu_custom_call.1}
  #allocation0 [shape = 'u32[]', space=smem, size = 0x4, offset = 0x4, fixed_abs, tag = 'smem constant byte address 0x4 - core index']
  #allocation1 [shape = 'u32[72,128]{1,0:T(1,128)}', space=vmem, size = 0x9000, scoped, tag = 'internal scratch']
  %s0 = inlined_call_operand.hbm [shape: f32[2,8,32], index: 0, kind: input, shape index: {}]
  %s1 = inlined_call_operand.hbm [shape: f32[2,1,8], index: 1, kind: input, shape index: {}]
  %s2 = inlined_call_operand.vmem [shape: f32[4], index: 2, kind: input, shape index: {}]
  %s3 = inlined_call_operand.vmem [shape: f32[32,32], index: 3, kind: input, shape index: {}]
  %s4 = inlined_call_operand.vmem [shape: f32[1,32], index: 4, kind: input, shape index: {}]
  %s5 = inlined_call_operand.vmem [shape: f32[32,32], index: 5, kind: input, shape index: {}]
  %s6 = inlined_call_operand.vmem [shape: f32[1,32], index: 6, kind: input, shape index: {}]
  %s7 = inlined_call_operand.vmem [shape: f32[32,32], index: 7, kind: input, shape index: {}]
  %s8 = inlined_call_operand.vmem [shape: f32[1,32], index: 8, kind: input, shape index: {}]
  %s9 = inlined_call_operand.hbm [shape: f32[32,32], index: 9, kind: input, shape index: {}]
  %s10 = inlined_call_operand.vmem [shape: f32[1,32], index: 10, kind: input, shape index: {}]
  %s11 = inlined_call_operand.vmem [shape: f32[1,32], index: 11, kind: input, shape index: {}]
  %s12 = inlined_call_operand.vmem [shape: f32[1,32], index: 12, kind: input, shape index: {}]
  %s13 = inlined_call_operand.hbm [shape: f32[32,64], index: 13, kind: input, shape index: {}]
  %s14 = inlined_call_operand.vmem [shape: f32[1,64], index: 14, kind: input, shape index: {}]
  %s15 = inlined_call_operand.vmem [shape: f32[64,32], index: 15, kind: input, shape index: {}]
  %s16 = inlined_call_operand.vmem [shape: f32[1,32], index: 16, kind: input, shape index: {}]
  %s17 = inlined_call_operand.vmem [shape: f32[1,32], index: 17, kind: input, shape index: {}]
  %s18 = inlined_call_operand.vmem [shape: f32[1,32], index: 18, kind: input, shape index: {}]
  %s19 = inlined_call_operand.hbm [shape: f32[2,8,32], index: 19, kind: output, shape index: {}]
  %s20 = sld [smem:[#allocation0]]
  $region129: #{tpu_custom_call.1} parent=0
    _
  %s22 = ssub.s32 1, %s20
  %s23 = scalar_select 0, %s22, %s20
  $region1: #{tpu_custom_call.1} parent=0
    #allocation2 [shape = 'u8[8192]{0}', space=vmem, size = 0x2000, scoped, tag = 'input window, operand 0']
    #allocation3 [shape = 's32[2]{0}', space=sflag, size = 0x8, scoped, tag = 'scoped memory for tpu_custom_call.1']
    #allocation4 [shape = 's32[2]{0}', space=sflag, size = 0x8, scoped, tag = 'scoped memory for tpu_custom_call.1']
    #allocation5 [shape = 's32[2]{0}', space=sflag, size = 0x8, scoped, tag = 'scoped memory for tpu_custom_call.1']
    #allocation6 [shape = 'u8[1024]{0}', space=vmem, size = 0x400, scoped, tag = 'input window, operand 1']
    #allocation7 [shape = 's32[2]{0}', space=sflag, size = 0x8, scoped, tag = 'scoped memory for tpu_custom_call.1']
    #allocation8 [shape = 'u8[512]{0}', space=smem, size = 0x200, scoped, tag = 'input window, operand 2, single buffered']
    #allocation9 [shape = 'u8[16384]{0}', space=vmem, size = 0x4000, scoped, tag = 'input window, operand 9, single buffered']
    #allocation10 [shape = 'u8[16384]{0}', space=vmem, size = 0x4000, scoped, tag = 'input window, operand 13, single buffered']
    #allocation11 [shape = 's32[1]{0}', space=sflag, size = 0x4, scoped, tag = 'scoped memory for tpu_custom_call.1']
    #allocation12 [shape = 'u8[8192]{0}', space=vmem, size = 0x2000, scoped, tag = 'output window, operand 0']
    %24 = vsyncpa [#allocation3], 0
    %s25 = scalar_lea.sflag [#allocation3], 1
    %26 = vsyncpa %s25, 0
    %27 = vsyncpa [#allocation7], 0
    %s28 = scalar_lea.sflag [#allocation7], 1
    %29 = vsyncpa %s28, 0
    %30 = vsyncpa [#allocation5], 0
    %31 = vsyncpa [#allocation11], 0
    %32 = vsyncpa [#allocation4], 0
    %s33 = scalar_lea.sflag [#allocation4], 1
    %34 = vsyncpa %s33, 0
    loop: start=0, step=1, limit=4
    $region2: #{tpu_custom_call.1} parent=1 // loop_pre_header
      _
    $region3: #{tpu_custom_call.1} parent=1 // loop_header
      %s36 = sphi 0, %s40
      %p37 = scmp.ge.s32.totalorder %s36, 4
      %s46 = sphi 0, %s48
      %s49 = sphi 0, %s46
      %s50 = sphi 0, %s49
      %s66 = sphi 0, %s50
      %s72 = sphi 0, %s74
      %s75 = sphi 0, %s72
      %s76 = sphi 0, %s75
      %s92 = sphi 0, %s76
      %s96 = sphi 0, %s96
      %s98 = sphi 0, %s96
      %s99 = sphi 0, %s98
      %s113 = sphi 0, %s99
      %s117 = sphi 0, %s117
      %s119 = sphi 0, %s117
      %s120 = sphi 0, %s119
      %s134 = sphi 0, %s120
      %s138 = sphi 0, %s138
      %s140 = sphi 0, %s138
      %s141 = sphi 0, %s140
      %s155 = sphi 0, %s141
      %s159 = sphi 0, %s159
      %s161 = sphi 0, %s159
      %s162 = sphi 0, %s161
      %s176 = sphi 0, %s162
      %s180 = sphi 0, %s180
      %s182 = sphi 0, %s180
      %s183 = sphi 0, %s182
      %s197 = sphi 0, %s183
      %s201 = sphi 0, %s201
      %s203 = sphi 0, %s201
      %s204 = sphi 0, %s203
      %s218 = sphi 0, %s204
      %s222 = sphi 0, %s222
      %s224 = sphi 0, %s222
      %s225 = sphi 0, %s224
      %s239 = sphi 0, %s225
      %s243 = sphi 0, %s243
      %s245 = sphi 0, %s243
      %s246 = sphi 0, %s245
      %s260 = sphi 0, %s246
      %s264 = sphi 0, %s264
      %s266 = sphi 0, %s264
      %s267 = sphi 0, %s266
      %s281 = sphi 0, %s267
      %s285 = sphi 0, %s285
      %s287 = sphi 0, %s285
      %s288 = sphi 0, %s287
      %s302 = sphi 0, %s288
      %s306 = sphi 0, %s306
      %s308 = sphi 0, %s306
      %s309 = sphi 0, %s308
      %s323 = sphi 0, %s309
      %s327 = sphi 0, %s327
      %s329 = sphi 0, %s327
      %s330 = sphi 0, %s329
      %s344 = sphi 0, %s330
      %s348 = sphi 0, %s348
      %s350 = sphi 0, %s348
      %s351 = sphi 0, %s350
      %s365 = sphi 0, %s351
      %s369 = sphi 0, %s369
      %s371 = sphi 0, %s369
      %s372 = sphi 0, %s371
      %s386 = sphi 0, %s372
      %s390 = sphi 0, %s390
      %s392 = sphi 0, %s390
      %s393 = sphi 0, %s392
      %s407 = sphi 0, %s393
      %s411 = sphi 0, %s411
      %s413 = sphi 0, %s411
      %s414 = sphi 0, %s413
      %s428 = sphi 0, %s414
      %s432 = sphi 0, %s432
      %s434 = sphi 0, %s432
      %s435 = sphi 0, %s434
      %s449 = sphi 0, %s435
      %s455 = sphi 0, %s457
      %s458 = sphi 0, %s455
      %s459 = sphi 0, %s458
      %s475 = sphi 0, %s459
    $region4: #{tpu_custom_call.1} parent=1 // loop_header_branch
      %39 = sbr.rel (%p37) target = $region8
    $region5: #{tpu_custom_call.1} parent=1 // loop_body
      %s41 = ssub.s32 %s36, 1
      %s42 = ssub.s32 %s36, 2
      %s43 = sadd.s32 %s36, 1
      %s44 = ssub.s32 %s36, %s43
      %p45 = scmp.eq.s32.totalorder %s44, 0
      %s47 = sadd.s32 %s46, 1
      %s48 = scalar_select %p45, %s46, %s47
      %p51 = pneg %p45
      %p52 = scmp.eq.s32.totalorder %s36, 1
      %p53 = por %p51, %p52
      %p54 = scmp.ne.s32.totalorder %s46, %s49
      %p55 = scmp.eq.s32.totalorder %s36, 0
      %p56 = por %p54, %p55
      %p57 = scmp.ne.s32.totalorder %s46, %s49
      %p58 = scmp.eq.s32.totalorder %s41, 1
      %p59 = por %p57, %p58
      %p60 = scmp.ne.s32.totalorder %s49, %s50
      %p61 = scmp.eq.s32.totalorder %s41, 0
      %p62 = por %p60, %p61
      %p63 = scmp.ne.s32.totalorder %s49, %s50
      %p64 = scmp.eq.s32.totalorder %s42, 1
      %p65 = por %p63, %p64
      %p67 = scmp.ne.s32.totalorder %s50, %s66
      %p68 = scmp.eq.s32.totalorder %s42, 0
      %p69 = por %p67, %p68
      %s70 = ssub.s32 %s36, %s43
      %p71 = scmp.eq.s32.totalorder %s70, 0
      %s73 = sadd.s32 %s72, 1
      %s74 = scalar_select %p71, %s72, %s73
      %p77 = pneg %p71
      %p78 = scmp.eq.s32.totalorder %s36, 1
      %p79 = por %p77, %p78
      %p80 = scmp.ne.s32.totalorder %s72, %s75
      %p81 = scmp.eq.s32.totalorder %s36, 0
      %p82 = por %p80, %p81
      %p83 = scmp.ne.s32.totalorder %s72, %s75
      %p84 = scmp.eq.s32.totalorder %s41, 1
      %p85 = por %p83, %p84
      %p86 = scmp.ne.s32.totalorder %s75, %s76
      %p87 = scmp.eq.s32.totalorder %s41, 0
      %p88 = por %p86, %p87
      %p89 = scmp.ne.s32.totalorder %s75, %s76
      %p90 = scmp.eq.s32.totalorder %s42, 1
      %p91 = por %p89, %p90
      %p93 = scmp.ne.s32.totalorder %s76, %s92
      %p94 = scmp.eq.s32.totalorder %s42, 0
      %p95 = por %p93, %p94
      %s97 = sadd.s32 %s96, 1
      %p100 = scmp.eq.s32.totalorder %s36, 1
      %p101 = scmp.ne.s32.totalorder %s96, %s98
      %p102 = scmp.eq.s32.totalorder %s36, 0
      %p103 = por %p101, %p102
      %p104 = scmp.ne.s32.totalorder %s96, %s98
      %p105 = scmp.eq.s32.totalorder %s41, 1
      %p106 = por %p104, %p105
      %p107 = scmp.ne.s32.totalorder %s98, %s99
      %p108 = scmp.eq.s32.totalorder %s41, 0
      %p109 = por %p107, %p108
      %p110 = scmp.ne.s32.totalorder %s98, %s99
      %p111 = scmp.eq.s32.totalorder %s42, 1
      %p112 = por %p110, %p111
      %p114 = scmp.ne.s32.totalorder %s99, %s113
      %p115 = scmp.eq.s32.totalorder %s42, 0
      %p116 = por %p114, %p115
      %s118 = sadd.s32 %s117, 1
      %p121 = scmp.eq.s32.totalorder %s36, 1
      %p122 = scmp.ne.s32.totalorder %s117, %s119
      %p123 = scmp.eq.s32.totalorder %s36, 0
      %p124 = por %p122, %p123
      %p125 = scmp.ne.s32.totalorder %s117, %s119
      %p126 = scmp.eq.s32.totalorder %s41, 1
      %p127 = por %p125, %p126
      %p128 = scmp.ne.s32.totalorder %s119, %s120
      %p129 = scmp.eq.s32.totalorder %s41, 0
      %p130 = por %p128, %p129
      %p131 = scmp.ne.s32.totalorder %s119, %s120
      %p132 = scmp.eq.s32.totalorder %s42, 1
      %p133 = por %p131, %p132
      %p135 = scmp.ne.s32.totalorder %s120, %s134
      %p136 = scmp.eq.s32.totalorder %s42, 0
      %p137 = por %p135, %p136
      %s139 = sadd.s32 %s138, 1
      %p142 = scmp.eq.s32.totalorder %s36, 1
      %p143 = scmp.ne.s32.totalorder %s138, %s140
      %p144 = scmp.eq.s32.totalorder %s36, 0
      %p145 = por %p143, %p144
      %p146 = scmp.ne.s32.totalorder %s138, %s140
      %p147 = scmp.eq.s32.totalorder %s41, 1
      %p148 = por %p146, %p147
      %p149 = scmp.ne.s32.totalorder %s140, %s141
      %p150 = scmp.eq.s32.totalorder %s41, 0
      %p151 = por %p149, %p150
      %p152 = scmp.ne.s32.totalorder %s140, %s141
      %p153 = scmp.eq.s32.totalorder %s42, 1
      %p154 = por %p152, %p153
      %p156 = scmp.ne.s32.totalorder %s141, %s155
      %p157 = scmp.eq.s32.totalorder %s42, 0
      %p158 = por %p156, %p157
      %s160 = sadd.s32 %s159, 1
      %p163 = scmp.eq.s32.totalorder %s36, 1
      %p164 = scmp.ne.s32.totalorder %s159, %s161
      %p165 = scmp.eq.s32.totalorder %s36, 0
      %p166 = por %p164, %p165
      %p167 = scmp.ne.s32.totalorder %s159, %s161
      %p168 = scmp.eq.s32.totalorder %s41, 1
      %p169 = por %p167, %p168
      %p170 = scmp.ne.s32.totalorder %s161, %s162
      %p171 = scmp.eq.s32.totalorder %s41, 0
      %p172 = por %p170, %p171
      %p173 = scmp.ne.s32.totalorder %s161, %s162
      %p174 = scmp.eq.s32.totalorder %s42, 1
      %p175 = por %p173, %p174
      %p177 = scmp.ne.s32.totalorder %s162, %s176
      %p178 = scmp.eq.s32.totalorder %s42, 0
      %p179 = por %p177, %p178
      %s181 = sadd.s32 %s180, 1
      %p184 = scmp.eq.s32.totalorder %s36, 1
      %p185 = scmp.ne.s32.totalorder %s180, %s182
      %p186 = scmp.eq.s32.totalorder %s36, 0
      %p187 = por %p185, %p186
      %p188 = scmp.ne.s32.totalorder %s180, %s182
      %p189 = scmp.eq.s32.totalorder %s41, 1
      %p190 = por %p188, %p189
      %p191 = scmp.ne.s32.totalorder %s182, %s183
      %p192 = scmp.eq.s32.totalorder %s41, 0
      %p193 = por %p191, %p192
      %p194 = scmp.ne.s32.totalorder %s182, %s183
      %p195 = scmp.eq.s32.totalorder %s42, 1
      %p196 = por %p194, %p195
      %p198 = scmp.ne.s32.totalorder %s183, %s197
      %p199 = scmp.eq.s32.totalorder %s42, 0
      %p200 = por %p198, %p199
      %s202 = sadd.s32 %s201, 1
      %p205 = scmp.eq.s32.totalorder %s36, 1
      %p206 = scmp.ne.s32.totalorder %s201, %s203
      %p207 = scmp.eq.s32.totalorder %s36, 0
      %p208 = por %p206, %p207
      %p209 = scmp.ne.s32.totalorder %s201, %s203
      %p210 = scmp.eq.s32.totalorder %s41, 1
      %p211 = por %p209, %p210
      %p212 = scmp.ne.s32.totalorder %s203, %s204
      %p213 = scmp.eq.s32.totalorder %s41, 0
      %p214 = por %p212, %p213
      %p215 = scmp.ne.s32.totalorder %s203, %s204
      %p216 = scmp.eq.s32.totalorder %s42, 1
      %p217 = por %p215, %p216
      %p219 = scmp.ne.s32.totalorder %s204, %s218
      %p220 = scmp.eq.s32.totalorder %s42, 0
      %p221 = por %p219, %p220
      %s223 = sadd.s32 %s222, 1
      %p226 = scmp.eq.s32.totalorder %s36, 1
      %p227 = scmp.ne.s32.totalorder %s222, %s224
      %p228 = scmp.eq.s32.totalorder %s36, 0
      %p229 = por %p227, %p228
      %p230 = scmp.ne.s32.totalorder %s222, %s224
      %p231 = scmp.eq.s32.totalorder %s41, 1
      %p232 = por %p230, %p231
      %p233 = scmp.ne.s32.totalorder %s224, %s225
      %p234 = scmp.eq.s32.totalorder %s41, 0
      %p235 = por %p233, %p234
      %p236 = scmp.ne.s32.totalorder %s224, %s225
      %p237 = scmp.eq.s32.totalorder %s42, 1
      %p238 = por %p236, %p237
      %p240 = scmp.ne.s32.totalorder %s225, %s239
      %p241 = scmp.eq.s32.totalorder %s42, 0
      %p242 = por %p240, %p241
      %s244 = sadd.s32 %s243, 1
      %p247 = scmp.eq.s32.totalorder %s36, 1
      %p248 = scmp.ne.s32.totalorder %s243, %s245
      %p249 = scmp.eq.s32.totalorder %s36, 0
      %p250 = por %p248, %p249
      %p251 = scmp.ne.s32.totalorder %s243, %s245
      %p252 = scmp.eq.s32.totalorder %s41, 1
      %p253 = por %p251, %p252
      %p254 = scmp.ne.s32.totalorder %s245, %s246
      %p255 = scmp.eq.s32.totalorder %s41, 0
      %p256 = por %p254, %p255
      %p257 = scmp.ne.s32.totalorder %s245, %s246
      %p258 = scmp.eq.s32.totalorder %s42, 1
      %p259 = por %p257, %p258
      %p261 = scmp.ne.s32.totalorder %s246, %s260
      %p262 = scmp.eq.s32.totalorder %s42, 0
      %p263 = por %p261, %p262
      %s265 = sadd.s32 %s264, 1
      %p268 = scmp.eq.s32.totalorder %s36, 1
      %p269 = scmp.ne.s32.totalorder %s264, %s266
      %p270 = scmp.eq.s32.totalorder %s36, 0
      %p271 = por %p269, %p270
      %p272 = scmp.ne.s32.totalorder %s264, %s266
      %p273 = scmp.eq.s32.totalorder %s41, 1
      %p274 = por %p272, %p273
      %p275 = scmp.ne.s32.totalorder %s266, %s267
      %p276 = scmp.eq.s32.totalorder %s41, 0
      %p277 = por %p275, %p276
      %p278 = scmp.ne.s32.totalorder %s266, %s267
      %p279 = scmp.eq.s32.totalorder %s42, 1
      %p280 = por %p278, %p279
      %p282 = scmp.ne.s32.totalorder %s267, %s281
      %p283 = scmp.eq.s32.totalorder %s42, 0
      %p284 = por %p282, %p283
      %s286 = sadd.s32 %s285, 1
      %p289 = scmp.eq.s32.totalorder %s36, 1
      %p290 = scmp.ne.s32.totalorder %s285, %s287
      %p291 = scmp.eq.s32.totalorder %s36, 0
      %p292 = por %p290, %p291
      %p293 = scmp.ne.s32.totalorder %s285, %s287
      %p294 = scmp.eq.s32.totalorder %s41, 1
      %p295 = por %p293, %p294
      %p296 = scmp.ne.s32.totalorder %s287, %s288
      %p297 = scmp.eq.s32.totalorder %s41, 0
      %p298 = por %p296, %p297
      %p299 = scmp.ne.s32.totalorder %s287, %s288
      %p300 = scmp.eq.s32.totalorder %s42, 1
      %p301 = por %p299, %p300
      %p303 = scmp.ne.s32.totalorder %s288, %s302
      %p304 = scmp.eq.s32.totalorder %s42, 0
      %p305 = por %p303, %p304
      %s307 = sadd.s32 %s306, 1
      %p310 = scmp.eq.s32.totalorder %s36, 1
      %p311 = scmp.ne.s32.totalorder %s306, %s308
      %p312 = scmp.eq.s32.totalorder %s36, 0
      %p313 = por %p311, %p312
      %p314 = scmp.ne.s32.totalorder %s306, %s308
      %p315 = scmp.eq.s32.totalorder %s41, 1
      %p316 = por %p314, %p315
      %p317 = scmp.ne.s32.totalorder %s308, %s309
      %p318 = scmp.eq.s32.totalorder %s41, 0
      %p319 = por %p317, %p318
      %p320 = scmp.ne.s32.totalorder %s308, %s309
      %p321 = scmp.eq.s32.totalorder %s42, 1
      %p322 = por %p320, %p321
      %p324 = scmp.ne.s32.totalorder %s309, %s323
      %p325 = scmp.eq.s32.totalorder %s42, 0
      %p326 = por %p324, %p325
      %s328 = sadd.s32 %s327, 1
      %p331 = scmp.eq.s32.totalorder %s36, 1
      %p332 = scmp.ne.s32.totalorder %s327, %s329
      %p333 = scmp.eq.s32.totalorder %s36, 0
      %p334 = por %p332, %p333
      %p335 = scmp.ne.s32.totalorder %s327, %s329
      %p336 = scmp.eq.s32.totalorder %s41, 1
      %p337 = por %p335, %p336
      %p338 = scmp.ne.s32.totalorder %s329, %s330
      %p339 = scmp.eq.s32.totalorder %s41, 0
      %p340 = por %p338, %p339
      %p341 = scmp.ne.s32.totalorder %s329, %s330
      %p342 = scmp.eq.s32.totalorder %s42, 1
      %p343 = por %p341, %p342
      %p345 = scmp.ne.s32.totalorder %s330, %s344
      %p346 = scmp.eq.s32.totalorder %s42, 0
      %p347 = por %p345, %p346
      %s349 = sadd.s32 %s348, 1
      %p352 = scmp.eq.s32.totalorder %s36, 1
      %p353 = scmp.ne.s32.totalorder %s348, %s350
      %p354 = scmp.eq.s32.totalorder %s36, 0
      %p355 = por %p353, %p354
      %p356 = scmp.ne.s32.totalorder %s348, %s350
      %p357 = scmp.eq.s32.totalorder %s41, 1
      %p358 = por %p356, %p357
      %p359 = scmp.ne.s32.totalorder %s350, %s351
      %p360 = scmp.eq.s32.totalorder %s41, 0
      %p361 = por %p359, %p360
      %p362 = scmp.ne.s32.totalorder %s350, %s351
      %p363 = scmp.eq.s32.totalorder %s42, 1
      %p364 = por %p362, %p363
      %p366 = scmp.ne.s32.totalorder %s351, %s365
      %p367 = scmp.eq.s32.totalorder %s42, 0
      %p368 = por %p366, %p367
      %s370 = sadd.s32 %s369, 1
      %p373 = scmp.eq.s32.totalorder %s36, 1
      %p374 = scmp.ne.s32.totalorder %s369, %s371
      %p375 = scmp.eq.s32.totalorder %s36, 0
      %p376 = por %p374, %p375
      %p377 = scmp.ne.s32.totalorder %s369, %s371
      %p378 = scmp.eq.s32.totalorder %s41, 1
      %p379 = por %p377, %p378
      %p380 = scmp.ne.s32.totalorder %s371, %s372
      %p381 = scmp.eq.s32.totalorder %s41, 0
      %p382 = por %p380, %p381
      %p383 = scmp.ne.s32.totalorder %s371, %s372
      %p384 = scmp.eq.s32.totalorder %s42, 1
      %p385 = por %p383, %p384
      %p387 = scmp.ne.s32.totalorder %s372, %s386
      %p388 = scmp.eq.s32.totalorder %s42, 0
      %p389 = por %p387, %p388
      %s391 = sadd.s32 %s390, 1
      %p394 = scmp.eq.s32.totalorder %s36, 1
      %p395 = scmp.ne.s32.totalorder %s390, %s392
      %p396 = scmp.eq.s32.totalorder %s36, 0
      %p397 = por %p395, %p396
      %p398 = scmp.ne.s32.totalorder %s390, %s392
      %p399 = scmp.eq.s32.totalorder %s41, 1
      %p400 = por %p398, %p399
      %p401 = scmp.ne.s32.totalorder %s392, %s393
      %p402 = scmp.eq.s32.totalorder %s41, 0
      %p403 = por %p401, %p402
      %p404 = scmp.ne.s32.totalorder %s392, %s393
      %p405 = scmp.eq.s32.totalorder %s42, 1
      %p406 = por %p404, %p405
      %p408 = scmp.ne.s32.totalorder %s393, %s407
      %p409 = scmp.eq.s32.totalorder %s42, 0
      %p410 = por %p408, %p409
      %s412 = sadd.s32 %s411, 1
      %p415 = scmp.eq.s32.totalorder %s36, 1
      %p416 = scmp.ne.s32.totalorder %s411, %s413
      %p417 = scmp.eq.s32.totalorder %s36, 0
      %p418 = por %p416, %p417
      %p419 = scmp.ne.s32.totalorder %s411, %s413
      %p420 = scmp.eq.s32.totalorder %s41, 1
      %p421 = por %p419, %p420
      %p422 = scmp.ne.s32.totalorder %s413, %s414
      %p423 = scmp.eq.s32.totalorder %s41, 0
      %p424 = por %p422, %p423
      %p425 = scmp.ne.s32.totalorder %s413, %s414
      %p426 = scmp.eq.s32.totalorder %s42, 1
      %p427 = por %p425, %p426
      %p429 = scmp.ne.s32.totalorder %s414, %s428
      %p430 = scmp.eq.s32.totalorder %s42, 0
      %p431 = por %p429, %p430
      %s433 = sadd.s32 %s432, 1
      %p436 = scmp.eq.s32.totalorder %s36, 1
      %p437 = scmp.ne.s32.totalorder %s432, %s434
      %p438 = scmp.eq.s32.totalorder %s36, 0
      %p439 = por %p437, %p438
      %p440 = scmp.ne.s32.totalorder %s432, %s434
      %p441 = scmp.eq.s32.totalorder %s41, 1
      %p442 = por %p440, %p441
      %p443 = scmp.ne.s32.totalorder %s434, %s435
      %p444 = scmp.eq.s32.totalorder %s41, 0
      %p445 = por %p443, %p444
      %p446 = scmp.ne.s32.totalorder %s434, %s435
      %p447 = scmp.eq.s32.totalorder %s42, 1
      %p448 = por %p446, %p447
      %p450 = scmp.ne.s32.totalorder %s435, %s449
      %p451 = scmp.eq.s32.totalorder %s42, 0
      %p452 = por %p450, %p451
      %s453 = ssub.s32 %s36, %s43
      %p454 = scmp.eq.s32.totalorder %s453, 0
      %s456 = sadd.s32 %s455, 1
      %s457 = scalar_select %p454, %s455, %s456
      %p460 = pneg %p454
      %p461 = scmp.eq.s32.totalorder %s36, 1
      %p462 = por %p460, %p461
      %p463 = scmp.ne.s32.totalorder %s455, %s458
      %p464 = scmp.eq.s32.totalorder %s36, 0
      %p465 = por %p463, %p464
      %p466 = scmp.ne.s32.totalorder %s455, %s458
      %p467 = scmp.eq.s32.totalorder %s41, 1
      %p468 = por %p466, %p467
      %p469 = scmp.ne.s32.totalorder %s458, %s459
      %p470 = scmp.eq.s32.totalorder %s41, 0
      %p471 = por %p469, %p470
      %p472 = scmp.ne.s32.totalorder %s458, %s459
      %p473 = scmp.eq.s32.totalorder %s42, 1
      %p474 = por %p472, %p473
      %p476 = scmp.ne.s32.totalorder %s459, %s475
      %p477 = scmp.eq.s32.totalorder %s42, 0
      %p478 = por %p476, %p477
      %p479 = scmp.le.s32.totalorder 1, %s36
      %p480 = scmp.lt.s32.totalorder %s36, 3
      %p481 = pnand %p479, %p480
      %p482 = pneg %p481
      // Predicated region
      $region9: #{tpu_custom_call.1} parent=5 // pred_check
        _
      $region10: #{tpu_custom_call.1} parent=5 // pred_check_branch
        %484 = sbr.rel (%p481) target = $region12
      $region11: #{tpu_custom_call.1} parent=5 // pred_region
        %s485 = ssub.s32 %s36, 1
        // Predicated region
        $region13: #{tpu_custom_call.1} parent=11 // pred_check
          %p486 = pneg %p109
        $region14: #{tpu_custom_call.1} parent=11 // pred_check_branch
          %488 = sbr.rel (%p486) target = $region16
        $region15: #{tpu_custom_call.1} parent=11 // pred_region
          %490 = vsyncadd [#allocation5], 0
          %s492 = sshll.u32 %s2, 4
          %s493 = int_to_ptr.vmem [resolvable:$true] %s492
          %495 = dma.vmem_to_smem %s493, 16, [#allocation8], [#allocation5]
        $region16: #{tpu_custom_call.1} parent=11 // pred_fallthru
          _
        // Predicated region
        $region17: #{tpu_custom_call.1} parent=11 // pred_check
          %p496 = pneg %p130
        $region18: #{tpu_custom_call.1} parent=11 // pred_check_branch
          %498 = sbr.rel (%p496) target = $region20
        $region19: #{tpu_custom_call.1} parent=11 // pred_region
          _
        $region20: #{tpu_custom_call.1} parent=11 // pred_fallthru
          _
        // Predicated region
        $region21: #{tpu_custom_call.1} parent=11 // pred_check
          %p499 = pneg %p151
        $region22: #{tpu_custom_call.1} parent=11 // pred_check_branch
          %501 = sbr.rel (%p499) target = $region24
        $region23: #{tpu_custom_call.1} parent=11 // pred_region
          _
        $region24: #{tpu_custom_call.1} parent=11 // pred_fallthru
          _
        // Predicated region
        $region25: #{tpu_custom_call.1} parent=11 // pred_check
          %p502 = pneg %p172
        $region26: #{tpu_custom_call.1} parent=11 // pred_check_branch
          %504 = sbr.rel (%p502) target = $region28
        $region27: #{tpu_custom_call.1} parent=11 // pred_region
          _
        $region28: #{tpu_custom_call.1} parent=11 // pred_fallthru
          _
        // Predicated region
        $region29: #{tpu_custom_call.1} parent=11 // pred_check
          %p505 = pneg %p193
        $region30: #{tpu_custom_call.1} parent=11 // pred_check_branch
          %507 = sbr.rel (%p505) target = $region32
        $region31: #{tpu_custom_call.1} parent=11 // pred_region
          _
        $region32: #{tpu_custom_call.1} parent=11 // pred_fallthru
          _
        // Predicated region
        $region33: #{tpu_custom_call.1} parent=11 // pred_check
          %p508 = pneg %p214
        $region34: #{tpu_custom_call.1} parent=11 // pred_check_branch
          %510 = sbr.rel (%p508) target = $region36
        $region35: #{tpu_custom_call.1} parent=11 // pred_region
          _
        $region36: #{tpu_custom_call.1} parent=11 // pred_fallthru
          _
        // Predicated region
        $region37: #{tpu_custom_call.1} parent=11 // pred_check
          %p511 = pneg %p235
        $region38: #{tpu_custom_call.1} parent=11 // pred_check_branch
          %513 = sbr.rel (%p511) target = $region40
        $region39: #{tpu_custom_call.1} parent=11 // pred_region
          _
        $region40: #{tpu_custom_call.1} parent=11 // pred_fallthru
          _
        // Predicated region
        $region41: #{tpu_custom_call.1} parent=11 // pred_check
          %p514 = pneg %p256
        $region42: #{tpu_custom_call.1} parent=11 // pred_check_branch
          %516 = sbr.rel (%p514) target = $region44
        $region43: #{tpu_custom_call.1} parent=11 // pred_region
          %518 = vsyncadd [#allocation7], 0
          %s519 = sshll.u32 %s9, 4
          %s520 = int_to_ptr.hbm [resolvable:$true] %s519
          %s521 = sshll.u32 [#allocation9], 4
          %s522 = int_to_ptr.vmem [resolvable:$true] %s521
          %527 = dma.hbm_to_vmem [thread:$0]  %s520, 512, %s522, [#allocation7], 128, 128, 8
        $region44: #{tpu_custom_call.1} parent=11 // pred_fallthru
          _
        // Predicated region
        $region45: #{tpu_custom_call.1} parent=11 // pred_check
          %p528 = pneg %p277
        $region46: #{tpu_custom_call.1} parent=11 // pred_check_branch
          %530 = sbr.rel (%p528) target = $region48
        $region47: #{tpu_custom_call.1} parent=11 // pred_region
          _
        $region48: #{tpu_custom_call.1} parent=11 // pred_fallthru
          _
        // Predicated region
        $region49: #{tpu_custom_call.1} parent=11 // pred_check
          %p531 = pneg %p298
        $region50: #{tpu_custom_call.1} parent=11 // pred_check_branch
          %533 = sbr.rel (%p531) target = $region52
        $region51: #{tpu_custom_call.1} parent=11 // pred_region
          _
        $region52: #{tpu_custom_call.1} parent=11 // pred_fallthru
          _
        // Predicated region
        $region53: #{tpu_custom_call.1} parent=11 // pred_check
          %p534 = pneg %p319
        $region54: #{tpu_custom_call.1} parent=11 // pred_check_branch
          %536 = sbr.rel (%p534) target = $region56
        $region55: #{tpu_custom_call.1} parent=11 // pred_region
          _
        $region56: #{tpu_custom_call.1} parent=11 // pred_fallthru
          _
        // Predicated region
        $region57: #{tpu_custom_call.1} parent=11 // pred_check
          %p537 = pneg %p340
        $region58: #{tpu_custom_call.1} parent=11 // pred_check_branch
          %539 = sbr.rel (%p537) target = $region60
        $region59: #{tpu_custom_call.1} parent=11 // pred_region
          %541 = vsyncadd [#allocation11], 0
          %s542 = sshll.u32 %s13, 4
          %s543 = int_to_ptr.hbm [resolvable:$true] %s542
          %s544 = sshll.u32 [#allocation10], 4
          %s545 = int_to_ptr.vmem [resolvable:$true] %s544
          %550 = dma.hbm_to_vmem [thread:$0]  %s543, 512, %s545, [#allocation11], 128, 128, 8
        $region60: #{tpu_custom_call.1} parent=11 // pred_fallthru
          _
        // Predicated region
        $region61: #{tpu_custom_call.1} parent=11 // pred_check
          %p551 = pneg %p361
        $region62: #{tpu_custom_call.1} parent=11 // pred_check_branch
          %553 = sbr.rel (%p551) target = $region64
        $region63: #{tpu_custom_call.1} parent=11 // pred_region
          _
        $region64: #{tpu_custom_call.1} parent=11 // pred_fallthru
          _
        // Predicated region
        $region65: #{tpu_custom_call.1} parent=11 // pred_check
          %p554 = pneg %p382
        $region66: #{tpu_custom_call.1} parent=11 // pred_check_branch
          %556 = sbr.rel (%p554) target = $region68
        $region67: #{tpu_custom_call.1} parent=11 // pred_region
          _
        $region68: #{tpu_custom_call.1} parent=11 // pred_fallthru
          _
        // Predicated region
        $region69: #{tpu_custom_call.1} parent=11 // pred_check
          %p557 = pneg %p403
        $region70: #{tpu_custom_call.1} parent=11 // pred_check_branch
          %559 = sbr.rel (%p557) target = $region72
        $region71: #{tpu_custom_call.1} parent=11 // pred_region
          _
        $region72: #{tpu_custom_call.1} parent=11 // pred_fallthru
          _
        // Predicated region
        $region73: #{tpu_custom_call.1} parent=11 // pred_check
          %p560 = pneg %p424
        $region74: #{tpu_custom_call.1} parent=11 // pred_check_branch
          %562 = sbr.rel (%p560) target = $region76
        $region75: #{tpu_custom_call.1} parent=11 // pred_region
          _
        $region76: #{tpu_custom_call.1} parent=11 // pred_fallthru
          _
        // Predicated region
        $region77: #{tpu_custom_call.1} parent=11 // pred_check
          %p563 = pneg %p445
        $region78: #{tpu_custom_call.1} parent=11 // pred_check_branch
          %565 = sbr.rel (%p563) target = $region80
        $region79: #{tpu_custom_call.1} parent=11 // pred_region
          _
        $region80: #{tpu_custom_call.1} parent=11 // pred_fallthru
          _
      $region12: #{tpu_custom_call.1} parent=5 // pred_fallthru
        _
      %p566 = scmp.lt.s32.totalorder %s36, 2
      // Predicated region
      $region81: #{tpu_custom_call.1} parent=5 // pred_check
        %p567 = pneg %p566
      $region82: #{tpu_custom_call.1} parent=5 // pred_check_branch
        %569 = sbr.rel (%p567) target = $region84
      $region83: #{tpu_custom_call.1} parent=5 // pred_region
        // Predicated region
        $region85: #{tpu_custom_call.1} parent=83 // pred_check
          %p570 = pneg %p56
        $region86: #{tpu_custom_call.1} parent=83 // pred_check_branch
          %572 = sbr.rel (%p570) target = $region88
        $region87: #{tpu_custom_call.1} parent=83 // pred_region
          %s573 = sand.u32 %s46, 1
          %s574 = scalar_lea.sflag [#allocation3], %s573
          %s575 = sand.u32 %s46, 1
          %s576 = smul.addr %s575, 8
          %s577 = scalar_lea.vmem [#allocation2], %s576
          %579 = vsyncadd %s574, 0
          %s580 = smul.addr %s36, 8
          %s581 = scalar_lea.hbm %s0, %s580
          %s583 = sshll.u32 %s581, 4
          %s584 = int_to_ptr.hbm [resolvable:$true] %s583
          %s585 = sshll.u32 %s577, 4
          %s586 = int_to_ptr.vmem [resolvable:$true] %s585
          %588 = dma.hbm_to_vmem [thread:$0]  %s584, 128, %s586, %s574
        $region88: #{tpu_custom_call.1} parent=83 // pred_fallthru
          _
        // Predicated region
        $region89: #{tpu_custom_call.1} parent=83 // pred_check
          %p589 = pneg %p82
        $region90: #{tpu_custom_call.1} parent=83 // pred_check_branch
          %591 = sbr.rel (%p589) target = $region92
        $region91: #{tpu_custom_call.1} parent=83 // pred_region
          %s592 = sand.u32 %s36, 1
          %s593 = scalar_lea.sflag [#allocation7], %s592
          %s594 = sand.u32 %s72, 1
          %s595 = scalar_lea.vmem [#allocation6], %s594
          %597 = vsyncadd %s593, 0
          %s598 = scalar_lea.hbm %s1, %s36
          %s600 = sshll.u32 %s598, 4
          %s601 = int_to_ptr.hbm [resolvable:$true] %s600
          %s602 = sshll.u32 %s595, 4
          %s603 = int_to_ptr.vmem [resolvable:$true] %s602
          %605 = dma.hbm_to_vmem [thread:$0]  %s601, 16, %s603, %s593
        $region92: #{tpu_custom_call.1} parent=83 // pred_fallthru
          _
      $region84: #{tpu_custom_call.1} parent=5 // pred_fallthru
        _
      %p606 = scmp.le.s32.totalorder 1, %s36
      %p607 = scmp.lt.s32.totalorder %s36, 3
      %p608 = pnand %p606, %p607
      %p609 = pneg %p608
      // Predicated region
      $region93: #{tpu_custom_call.1} parent=5 // pred_check
        _
      $region94: #{tpu_custom_call.1} parent=5 // pred_check_branch
        %611 = sbr.rel (%p608) target = $region96
      $region95: #{tpu_custom_call.1} parent=5 // pred_region
        %s612 = ssub.s32 %s36, 1
        %s613 = sand.u32 %s49, 1
        %s614 = scalar_lea.sflag [#allocation3], %s613
        %s615 = sand.u32 %s49, 1
        %s616 = smul.addr %s615, 8
        %s617 = scalar_lea.vmem [#allocation2], %s616
        // Predicated region
        $region97: #{tpu_custom_call.1} parent=95 // pred_check
          %p618 = pneg %p62
        $region98: #{tpu_custom_call.1} parent=95 // pred_check_branch
          %620 = sbr.rel (%p618) target = $region100
        $region99: #{tpu_custom_call.1} parent=95 // pred_region
          %622 = dma.done %s614, 128
        $region100: #{tpu_custom_call.1} parent=95 // pred_fallthru
          _
        %s623 = sand.u32 %s41, 1
        %s624 = scalar_lea.sflag [#allocation7], %s623
        %s625 = sand.u32 %s75, 1
        %s626 = scalar_lea.vmem [#allocation6], %s625
        // Predicated region
        $region101: #{tpu_custom_call.1} parent=95 // pred_check
          %p627 = pneg %p88
        $region102: #{tpu_custom_call.1} parent=95 // pred_check_branch
          %629 = sbr.rel (%p627) target = $region104
        $region103: #{tpu_custom_call.1} parent=95 // pred_region
          %631 = dma.done %s624, 16
        $region104: #{tpu_custom_call.1} parent=95 // pred_fallthru
          _
        // Predicated region
        $region105: #{tpu_custom_call.1} parent=95 // pred_check
          %p632 = pneg %p109
        $region106: #{tpu_custom_call.1} parent=95 // pred_check_branch
          %634 = sbr.rel (%p632) target = $region108
        $region107: #{tpu_custom_call.1} parent=95 // pred_region
          %636 = dma.done [#allocation5], 16
        $region108: #{tpu_custom_call.1} parent=95 // pred_fallthru
          _
        // Predicated region
        $region109: #{tpu_custom_call.1} parent=95 // pred_check
          %p637 = pneg %p256
        $region110: #{tpu_custom_call.1} parent=95 // pred_check_branch
          %639 = sbr.rel (%p637) target = $region112
        $region111: #{tpu_custom_call.1} parent=95 // pred_region
          %641 = dma.done [#allocation7], 512
        $region112: #{tpu_custom_call.1} parent=95 // pred_fallthru
          _
        // Predicated region
        $region113: #{tpu_custom_call.1} parent=95 // pred_check
          %p642 = pneg %p340
        $region114: #{tpu_custom_call.1} parent=95 // pred_check_branch
          %644 = sbr.rel (%p642) target = $region116
        $region115: #{tpu_custom_call.1} parent=95 // pred_region
          %646 = dma.done [#allocation11], 512
        $region116: #{tpu_custom_call.1} parent=95 // pred_fallthru
          _
        %647 = sfence
        %s648 = sand.u32 %s49, 1
        %s649 = scalar_lea.sflag [#allocation3], %s648
        %s650 = sand.u32 %s49, 1
        %s651 = smul.addr %s650, 8
        %s652 = scalar_lea.vmem [#allocation2], %s651
        %p653 = pneg %p62
        %p654 = pneg %p59
        %s655 = sand.u32 %s41, 1
        %s656 = scalar_lea.sflag [#allocation7], %s655
        %s657 = sand.u32 %s75, 1
        %s658 = scalar_lea.vmem [#allocation6], %s657
        %p659 = pneg %p88
        %p660 = pneg %p85
        %p661 = pneg %p109
        %p662 = pneg %p106
        %p663 = pneg %p130
        %p664 = pneg %p127
        %p665 = pneg %p151
        %p666 = pneg %p148
        %p667 = pneg %p172
        %p668 = pneg %p169
        %p669 = pneg %p193
        %p670 = pneg %p190
        %p671 = pneg %p214
        %p672 = pneg %p211
        %p673 = pneg %p235
        %p674 = pneg %p232
        %p675 = pneg %p256
        %p676 = pneg %p253
        %p677 = pneg %p277
        %p678 = pneg %p274
        %p679 = pneg %p298
        %p680 = pneg %p295
        %p681 = pneg %p319
        %p682 = pneg %p316
        %p683 = pneg %p340
        %p684 = pneg %p337
        %p685 = pneg %p361
        %p686 = pneg %p358
        %p687 = pneg %p382
        %p688 = pneg %p379
        %p689 = pneg %p403
        %p690 = pneg %p400
        %p691 = pneg %p424
        %p692 = pneg %p421
        %p693 = pneg %p445
        %p694 = pneg %p442
        %p695 = pneg %p471
        %p696 = pneg %p468
        %s697 = sand.u32 %s458, 1
        %s698 = scalar_lea.sflag [#allocation4], %s697
        %s699 = sand.u32 %s458, 1
        %s700 = smul.addr %s699, 8
        %s701 = scalar_lea.vmem [#allocation12], %s700
        %v702 = vld [vmem:[%s617] sm:$0xff]
        %v703 = vld [vmem:[%s626] sm:$0x1]
        %v704 = vld [vmem:[%s3] sm:$0xff]
        %v705 = vld [vmem:[%s3 + $0x8] sm:$0xff]
        %v706 = vld [vmem:[%s3 + $0x10] sm:$0xff]
        %v707 = vld [vmem:[%s3 + $0x18] sm:$0xff]
        %v708 = vld [vmem:[%s4] sm:$0x1]
        %v710 = vperm.slane %v708, 0
        %vm712 = vcmask 261120
        %v714 = vsel %vm712, %v702, 0
        %716 = vmatpush.msra.mxu0 0.0
        %717 = vmatpush.msra.mxu0 0.0
        %718 = vmatpush.msra.mxu0 0.0
        %719 = vmatpush.msra.mxu0 0.0
        %720 = vmatpush.msra.mxu0 0.0
        %721 = vmatpush.msra.mxu0 0.0
        %722 = vmatpush.msra.mxu0 0.0
        %723 = vmatpush.msra.mxu0 0.0
        %724 = vmatpush.msra.mxu0 0.0
        %725 = vmatpush.msra.mxu0 0.0
        %726 = vmatpush.msra.mxu0 0.0
        %727 = vmatpush.msra.mxu0 0.0
        %728 = vmatpush.msra.mxu0 %v707
        %729 = vmatpush.msra.mxu0 %v706
        %730 = vmatpush.msra.mxu0 %v705
        %731 = vmatpush.msra.mxu0 %v704
        %732 = vmatmul.f32.gmra.mxu0 %v714
        %v733 = vpop.f32.mrf.mxu0
        %v734 = vadd.f32 %v710, %v733
        %735 = vdwg.mxu0
        %v736 = vld [vmem:[%s5] sm:$0xff]
        %v737 = vld [vmem:[%s5 + $0x8] sm:$0xff]
        %v738 = vld [vmem:[%s5 + $0x10] sm:$0xff]
        %v739 = vld [vmem:[%s5 + $0x18] sm:$0xff]
        %v740 = vld [vmem:[%s6] sm:$0x1]
        %v742 = vperm.slane %v740, 0
        %744 = vmatpush.msra.mxu0 0.0
        %745 = vmatpush.msra.mxu0 0.0
        %746 = vmatpush.msra.mxu0 0.0
        %747 = vmatpush.msra.mxu0 0.0
        %748 = vmatpush.msra.mxu0 0.0
        %749 = vmatpush.msra.mxu0 0.0
        %750 = vmatpush.msra.mxu0 0.0
        %751 = vmatpush.msra.mxu0 0.0
        %752 = vmatpush.msra.mxu0 0.0
        %753 = vmatpush.msra.mxu0 0.0
        %754 = vmatpush.msra.mxu0 0.0
        %755 = vmatpush.msra.mxu0 0.0
        %756 = vmatpush.msra.mxu0 %v739
        %757 = vmatpush.msra.mxu0 %v738
        %758 = vmatpush.msra.mxu0 %v737
        %759 = vmatpush.msra.mxu0 %v736
        %760 = vmatmul.f32.gmra.mxu0 %v714
        %v761 = vpop.f32.mrf.mxu0
        %v762 = vadd.f32 %v742, %v761
        %763 = vdwg.mxu0
        %v764 = vld [vmem:[%s7] sm:$0xff]
        %v765 = vld [vmem:[%s7 + $0x8] sm:$0xff]
        %v766 = vld [vmem:[%s7 + $0x10] sm:$0xff]
        %v767 = vld [vmem:[%s7 + $0x18] sm:$0xff]
        %v768 = vld [vmem:[%s8] sm:$0x1]
        %v770 = vperm.slane %v768, 0
        %772 = vmatpush.msra.mxu0 0.0
        %773 = vmatpush.msra.mxu0 0.0
        %774 = vmatpush.msra.mxu0 0.0
        %775 = vmatpush.msra.mxu0 0.0
        %776 = vmatpush.msra.mxu0 0.0
        %777 = vmatpush.msra.mxu0 0.0
        %778 = vmatpush.msra.mxu0 0.0
        %779 = vmatpush.msra.mxu0 0.0
        %780 = vmatpush.msra.mxu0 0.0
        %781 = vmatpush.msra.mxu0 0.0
        %782 = vmatpush.msra.mxu0 0.0
        %783 = vmatpush.msra.mxu0 0.0
        %784 = vmatpush.msra.mxu0 %v767
        %785 = vmatpush.msra.mxu0 %v766
        %786 = vmatpush.msra.mxu0 %v765
        %787 = vmatpush.msra.mxu0 %v764
        %788 = vmatmul.f32.gmra.mxu0 %v714
        %v789 = vpop.f32.mrf.mxu0
        %v790 = vadd.f32 %v770, %v789
        %791 = vdwg.mxu0
        %vm792 = vcmask 64512
        %v794 = vsel %vm792, %v734, 0
        %v797 = vsel %vm792, %v762, 0
        %799 = vmatpush.xpose.msra.mxu0 0.0
        %800 = vmatpush.xpose.msra.mxu0 0.0
        %801 = vmatpush.xpose.msra.mxu0 0.0
        %802 = vmatpush.xpose.msra.mxu0 0.0
        %803 = vmatpush.xpose.msra.mxu0 0.0
        %804 = vmatpush.xpose.msra.mxu0 0.0
        %805 = vmatpush.xpose.msra.mxu0 0.0
        %806 = vmatpush.xpose.msra.mxu0 0.0
        %807 = vmatpush.xpose.msra.mxu0 0.0
        %808 = vmatpush.xpose.msra.mxu0 0.0
        %809 = vmatpush.xpose.msra.mxu0 0.0
        %810 = vmatpush.xpose.msra.mxu0 0.0
        %811 = vmatpush.xpose.msra.mxu0 0.0
        %812 = vmatpush.xpose.msra.mxu0 0.0
        %813 = vmatpush.xpose.msra.mxu0 0.0
        %814 = vmatpush.xpose.msra.mxu0 %v797
        %815 = vmatmul.f32.gmra.mxu0 %v794
        %v816 = vpop.f32.mrf.mxu0
        %v817 = vadd.f32 0.0, %v816
        %818 = vdwg.mxu0
        %v819 = vmul.f32 %v817, 0.35355338
        %v821 = vperm.slane %v703, 0
        %v823 = vadd.f32 %v819, %v821
        %v824 = vsel %vm792, %v823, -inf
        %825 = vmax.xlane.f32.xlu0 %v824
        %v826 = vpop.xlane.xlu0 %825
        %v827 = vsub.f32 %v823, %v826
        %v828 = vmul.f32 %v827, 1.442695
        %v829 = vpow.pop %v828
        %v830 = vsel %vm792, %v829, 0.0
        %831 = vadd.xlane.f32.xlu0 %v830
        %v832 = vpop.xlane.xlu0 %831
        %v833 = vrcp.pop %v832
        %v834 = vmul.f32 %v832, %v833
        %v835 = vsub.f32 1.0, %v834
        %v836 = vmul.f32 %v833, %v835
        %v837 = vadd.f32 %v833, %v836
        %vm838 = vweird.f32 %v832
        %vm839 = vweird.f32 %v833
        %vm840 = vmor %vm838, %vm839
        %v841 = vsel %vm840, %v833, %v837
        %v842 = vand.u32 2147483647, %v832
        %vm843 = vcmp.eq.f32.partialorder %v842, 8.507059e+37
        %v844 = vand.u32 %v832, 2147483648
        %v845 = vor.u32 1.1754944e-38, %v844
        %v846 = vsel %vm843, %v845, %v841
        %v847 = vmul.f32 %v829, %v846
        %s848 = sld [smem:[#allocation8]]
        %v850 = vsel %vm792, %v847, 0
        %852 = vmatpush.msra.mxu0 0.0
        %853 = vmatpush.msra.mxu0 0.0
        %854 = vmatpush.msra.mxu0 0.0
        %855 = vmatpush.msra.mxu0 0.0
        %856 = vmatpush.msra.mxu0 0.0
        %857 = vmatpush.msra.mxu0 0.0
        %858 = vmatpush.msra.mxu0 0.0
        %859 = vmatpush.msra.mxu0 0.0
        %860 = vmatpush.msra.mxu0 0.0
        %861 = vmatpush.msra.mxu0 0.0
        %862 = vmatpush.msra.mxu0 0.0
        %863 = vmatpush.msra.mxu0 0.0
        %864 = vmatpush.msra.mxu0 0.0
        %865 = vmatpush.msra.mxu0 0.0
        %866 = vmatpush.msra.mxu0 0.0
        %867 = vmatpush.msra.mxu0 %v790
        %868 = vmatmul.f32.gmra.mxu0 %v850
        %v869 = vpop.f32.mrf.mxu0
        %v870 = vadd.f32 0.0, %v869
        %871 = vdwg.mxu0
        %v872 = vstv %s848
        %v873 = vmul.f32 %v870, %v872
        %v874 = vld [vmem:[#allocation9] sm:$0xff]
        %875 = vrot.lane.b32.xlu0 %v734, 120
        %v876 = vpop.permute.xlu0 %875
        %877 = vrot.lane.b32.xlu0 %v762, 120
        %v878 = vpop.permute.xlu0 %877
        %v879 = vsel %vm792, %v876, 0
        %v881 = vsel %vm792, %v878, 0
        %883 = vmatpush.xpose.msra.mxu0 0.0
        %884 = vmatpush.xpose.msra.mxu0 0.0
        %885 = vmatpush.xpose.msra.mxu0 0.0
        %886 = vmatpush.xpose.msra.mxu0 0.0
        %887 = vmatpush.xpose.msra.mxu0 0.0
        %888 = vmatpush.xpose.msra.mxu0 0.0
        %889 = vmatpush.xpose.msra.mxu0 0.0
        %890 = vmatpush.xpose.msra.mxu0 0.0
        %891 = vmatpush.xpose.msra.mxu0 0.0
        %892 = vmatpush.xpose.msra.mxu0 0.0
        %893 = vmatpush.xpose.msra.mxu0 0.0
        %894 = vmatpush.xpose.msra.mxu0 0.0
        %895 = vmatpush.xpose.msra.mxu0 0.0
        %896 = vmatpush.xpose.msra.mxu0 0.0
        %897 = vmatpush.xpose.msra.mxu0 0.0
        %898 = vmatpush.xpose.msra.mxu0 %v881
        %899 = vmatmul.f32.gmra.mxu0 %v879
        %v900 = vpop.f32.mrf.mxu0
        %v901 = vadd.f32 0.0, %v900
        %902 = vdwg.mxu0
        %v903 = vmul.f32 %v901, 0.35355338
        %v904 = vadd.f32 %v903, %v821
        %v905 = vsel %vm792, %v904, -inf
        %906 = vmax.xlane.f32.xlu0 %v905
        %v907 = vpop.xlane.xlu0 %906
        %v908 = vsub.f32 %v904, %v907
        %v909 = vmul.f32 %v908, 1.442695
        %v910 = vpow.pop %v909
        %v911 = vsel %vm792, %v910, 0.0
        %912 = vadd.xlane.f32.xlu0 %v911
        %v913 = vpop.xlane.xlu0 %912
        %v914 = vrcp.pop %v913
        %v915 = vmul.f32 %v913, %v914
        %v916 = vsub.f32 1.0, %v915
        %v917 = vmul.f32 %v914, %v916
        %v918 = vadd.f32 %v914, %v917
        %vm919 = vweird.f32 %v913
        %vm920 = vweird.f32 %v914
        %vm921 = vmor %vm919, %vm920
        %v922 = vsel %vm921, %v914, %v918
        %v923 = vand.u32 2147483647, %v913
        %vm924 = vcmp.eq.f32.partialorder %v923, 8.507059e+37
        %v925 = vand.u32 %v913, 2147483648
        %v926 = vor.u32 1.1754944e-38, %v925
        %v927 = vsel %vm924, %v926, %v922
        %v928 = vmul.f32 %v910, %v927
        %s929 = sld [smem:[#allocation8 + $0x1]]
        %931 = vrot.lane.b32.xlu0 %v790, 120
        %v932 = vpop.permute.xlu0 %931
        %v935 = vsel %vm792, %v928, 0
        %937 = vmatpush.msra.mxu0 0.0
        %938 = vmatpush.msra.mxu0 0.0
        %939 = vmatpush.msra.mxu0 0.0
        %940 = vmatpush.msra.mxu0 0.0
        %941 = vmatpush.msra.mxu0 0.0
        %942 = vmatpush.msra.mxu0 0.0
        %943 = vmatpush.msra.mxu0 0.0
        %944 = vmatpush.msra.mxu0 0.0
        %945 = vmatpush.msra.mxu0 0.0
        %946 = vmatpush.msra.mxu0 0.0
        %947 = vmatpush.msra.mxu0 0.0
        %948 = vmatpush.msra.mxu0 0.0
        %949 = vmatpush.msra.mxu0 0.0
        %950 = vmatpush.msra.mxu0 0.0
        %951 = vmatpush.msra.mxu0 0.0
        %952 = vmatpush.msra.mxu0 %v932
        %953 = vmatmul.f32.gmra.mxu0 %v935
        %v954 = vpop.f32.mrf.mxu0
        %v955 = vadd.f32 0.0, %v954
        %956 = vdwg.mxu0
        %v957 = vstv %s929
        %v958 = vmul.f32 %v955, %v957
        %v959 = vld [vmem:[#allocation9 + $0x8] sm:$0xff]
        %v961 = vsel %vm792, %v958, 0
        %963 = vmatpush.msra.mxu0 0.0
        %964 = vmatpush.msra.mxu0 0.0
        %965 = vmatpush.msra.mxu0 0.0
        %966 = vmatpush.msra.mxu0 0.0
        %967 = vmatpush.msra.mxu0 0.0
        %968 = vmatpush.msra.mxu0 0.0
        %969 = vmatpush.msra.mxu0 0.0
        %970 = vmatpush.msra.mxu0 0.0
        %971 = vmatpush.msra.mxu0 0.0
        %972 = vmatpush.msra.mxu0 0.0
        %973 = vmatpush.msra.mxu0 0.0
        %974 = vmatpush.msra.mxu0 0.0
        %975 = vmatpush.msra.mxu0 0.0
        %976 = vmatpush.msra.mxu0 0.0
        %977 = vmatpush.msra.mxu0 0.0
        %978 = vmatpush.msra.mxu0 %v959
        %979 = vmatmul.f32.gmra.mxu0 %v961
        %v980 = vpop.f32.mrf.mxu0
        %v981 = vadd.f32 0.0, %v980
        %982 = vdwg.mxu0
        %v984 = vsel %vm792, %v873, 0
        %986 = vmatpush.msra.mxu0 0.0
        %987 = vmatpush.msra.mxu0 0.0
        %988 = vmatpush.msra.mxu0 0.0
        %989 = vmatpush.msra.mxu0 0.0
        %990 = vmatpush.msra.mxu0 0.0
        %991 = vmatpush.msra.mxu0 0.0
        %992 = vmatpush.msra.mxu0 0.0
        %993 = vmatpush.msra.mxu0 0.0
        %994 = vmatpush.msra.mxu0 0.0
        %995 = vmatpush.msra.mxu0 0.0
        %996 = vmatpush.msra.mxu0 0.0
        %997 = vmatpush.msra.mxu0 0.0
        %998 = vmatpush.msra.mxu0 0.0
        %999 = vmatpush.msra.mxu0 0.0
        %1000 = vmatpush.msra.mxu0 0.0
        %1001 = vmatpush.msra.mxu0 %v874
        %1002 = vmatmul.f32.gmra.mxu0 %v984
        %v1003 = vpop.f32.mrf.mxu0
        %v1004 = vadd.f32 %v981, %v1003
        %1005 = vdwg.mxu0
        %1006 = vrot.lane.b32.xlu0 %v734, 112
        %v1007 = vpop.permute.xlu0 %1006
        %1008 = vrot.lane.b32.xlu0 %v762, 112
        %v1009 = vpop.permute.xlu0 %1008
        %v1010 = vsel %vm792, %v1007, 0
        %v1012 = vsel %vm792, %v1009, 0
        %1014 = vmatpush.xpose.msra.mxu0 0.0
        %1015 = vmatpush.xpose.msra.mxu0 0.0
        %1016 = vmatpush.xpose.msra.mxu0 0.0
        %1017 = vmatpush.xpose.msra.mxu0 0.0
        %1018 = vmatpush.xpose.msra.mxu0 0.0
        %1019 = vmatpush.xpose.msra.mxu0 0.0
        %1020 = vmatpush.xpose.msra.mxu0 0.0
        %1021 = vmatpush.xpose.msra.mxu0 0.0
        %1022 = vmatpush.xpose.msra.mxu0 0.0
        %1023 = vmatpush.xpose.msra.mxu0 0.0
        %1024 = vmatpush.xpose.msra.mxu0 0.0
        %1025 = vmatpush.xpose.msra.mxu0 0.0
        %1026 = vmatpush.xpose.msra.mxu0 0.0
        %1027 = vmatpush.xpose.msra.mxu0 0.0
        %1028 = vmatpush.xpose.msra.mxu0 0.0
        %1029 = vmatpush.xpose.msra.mxu0 %v1012
        %1030 = vmatmul.f32.gmra.mxu0 %v1010
        %v1031 = vpop.f32.mrf.mxu0
        %v1032 = vadd.f32 0.0, %v1031
        %1033 = vdwg.mxu0
        %v1034 = vmul.f32 %v1032, 0.35355338
        %v1035 = vadd.f32 %v1034, %v821
        %v1036 = vsel %vm792, %v1035, -inf
        %1037 = vmax.xlane.f32.xlu0 %v1036
        %v1038 = vpop.xlane.xlu0 %1037
        %v1039 = vsub.f32 %v1035, %v1038
        %v1040 = vmul.f32 %v1039, 1.442695
        %v1041 = vpow.pop %v1040
        %v1042 = vsel %vm792, %v1041, 0.0
        %1043 = vadd.xlane.f32.xlu0 %v1042
        %v1044 = vpop.xlane.xlu0 %1043
        %v1045 = vrcp.pop %v1044
        %v1046 = vmul.f32 %v1044, %v1045
        %v1047 = vsub.f32 1.0, %v1046
        %v1048 = vmul.f32 %v1045, %v1047
        %v1049 = vadd.f32 %v1045, %v1048
        %vm1050 = vweird.f32 %v1044
        %vm1051 = vweird.f32 %v1045
        %vm1052 = vmor %vm1050, %vm1051
        %v1053 = vsel %vm1052, %v1045, %v1049
        %v1054 = vand.u32 2147483647, %v1044
        %vm1055 = vcmp.eq.f32.partialorder %v1054, 8.507059e+37
        %v1056 = vand.u32 %v1044, 2147483648
        %v1057 = vor.u32 1.1754944e-38, %v1056
        %v1058 = vsel %vm1055, %v1057, %v1053
        %v1059 = vmul.f32 %v1041, %v1058
        %s1060 = sld [smem:[#allocation8 + $0x2]]
        %1061 = vrot.lane.b32.xlu0 %v790, 112
        %v1062 = vpop.permute.xlu0 %1061
        %v1065 = vsel %vm792, %v1059, 0
        %1067 = vmatpush.msra.mxu0 0.0
        %1068 = vmatpush.msra.mxu0 0.0
        %1069 = vmatpush.msra.mxu0 0.0
        %1070 = vmatpush.msra.mxu0 0.0
        %1071 = vmatpush.msra.mxu0 0.0
        %1072 = vmatpush.msra.mxu0 0.0
        %1073 = vmatpush.msra.mxu0 0.0
        %1074 = vmatpush.msra.mxu0 0.0
        %1075 = vmatpush.msra.mxu0 0.0
        %1076 = vmatpush.msra.mxu0 0.0
        %1077 = vmatpush.msra.mxu0 0.0
        %1078 = vmatpush.msra.mxu0 0.0
        %1079 = vmatpush.msra.mxu0 0.0
        %1080 = vmatpush.msra.mxu0 0.0
        %1081 = vmatpush.msra.mxu0 0.0
        %1082 = vmatpush.msra.mxu0 %v1062
        %1083 = vmatmul.f32.gmra.mxu0 %v1065
        %v1084 = vpop.f32.mrf.mxu0
        %v1085 = vadd.f32 0.0, %v1084
        %1086 = vdwg.mxu0
        %v1087 = vstv %s1060
        %v1088 = vmul.f32 %v1085, %v1087
        %v1089 = vld [vmem:[#allocation9 + $0x10] sm:$0xff]
        %v1091 = vsel %vm792, %v1088, 0
        %1093 = vmatpush.msra.mxu0 0.0
        %1094 = vmatpush.msra.mxu0 0.0
        %1095 = vmatpush.msra.mxu0 0.0
        %1096 = vmatpush.msra.mxu0 0.0
        %1097 = vmatpush.msra.mxu0 0.0
        %1098 = vmatpush.msra.mxu0 0.0
        %1099 = vmatpush.msra.mxu0 0.0
        %1100 = vmatpush.msra.mxu0 0.0
        %1101 = vmatpush.msra.mxu0 0.0
        %1102 = vmatpush.msra.mxu0 0.0
        %1103 = vmatpush.msra.mxu0 0.0
        %1104 = vmatpush.msra.mxu0 0.0
        %1105 = vmatpush.msra.mxu0 0.0
        %1106 = vmatpush.msra.mxu0 0.0
        %1107 = vmatpush.msra.mxu0 0.0
        %1108 = vmatpush.msra.mxu0 %v1089
        %1109 = vmatmul.f32.gmra.mxu0 %v1091
        %v1110 = vpop.f32.mrf.mxu0
        %v1111 = vadd.f32 0.0, %v1110
        %1112 = vdwg.mxu0
        %v1113 = vadd.f32 %v1004, %v1111
        %1114 = vrot.lane.b32.xlu0 %v734, 104
        %v1115 = vpop.permute.xlu0 %1114
        %1116 = vrot.lane.b32.xlu0 %v762, 104
        %v1117 = vpop.permute.xlu0 %1116
        %v1118 = vsel %vm792, %v1115, 0
        %v1120 = vsel %vm792, %v1117, 0
        %1122 = vmatpush.xpose.msra.mxu0 0.0
        %1123 = vmatpush.xpose.msra.mxu0 0.0
        %1124 = vmatpush.xpose.msra.mxu0 0.0
        %1125 = vmatpush.xpose.msra.mxu0 0.0
        %1126 = vmatpush.xpose.msra.mxu0 0.0
        %1127 = vmatpush.xpose.msra.mxu0 0.0
        %1128 = vmatpush.xpose.msra.mxu0 0.0
        %1129 = vmatpush.xpose.msra.mxu0 0.0
        %1130 = vmatpush.xpose.msra.mxu0 0.0
        %1131 = vmatpush.xpose.msra.mxu0 0.0
        %1132 = vmatpush.xpose.msra.mxu0 0.0
        %1133 = vmatpush.xpose.msra.mxu0 0.0
        %1134 = vmatpush.xpose.msra.mxu0 0.0
        %1135 = vmatpush.xpose.msra.mxu0 0.0
        %1136 = vmatpush.xpose.msra.mxu0 0.0
        %1137 = vmatpush.xpose.msra.mxu0 %v1120
        %1138 = vmatmul.f32.gmra.mxu0 %v1118
        %v1139 = vpop.f32.mrf.mxu0
        %v1140 = vadd.f32 0.0, %v1139
        %1141 = vdwg.mxu0
        %v1142 = vmul.f32 %v1140, 0.35355338
        %v1143 = vadd.f32 %v1142, %v821
        %v1144 = vsel %vm792, %v1143, -inf
        %1145 = vmax.xlane.f32.xlu0 %v1144
        %v1146 = vpop.xlane.xlu0 %1145
        %v1147 = vsub.f32 %v1143, %v1146
        %v1148 = vmul.f32 %v1147, 1.442695
        %v1149 = vpow.pop %v1148
        %v1150 = vsel %vm792, %v1149, 0.0
        %1151 = vadd.xlane.f32.xlu0 %v1150
        %v1152 = vpop.xlane.xlu0 %1151
        %v1153 = vrcp.pop %v1152
        %v1154 = vmul.f32 %v1152, %v1153
        %v1155 = vsub.f32 1.0, %v1154
        %v1156 = vmul.f32 %v1153, %v1155
        %v1157 = vadd.f32 %v1153, %v1156
        %vm1158 = vweird.f32 %v1152
        %vm1159 = vweird.f32 %v1153
        %vm1160 = vmor %vm1158, %vm1159
        %v1161 = vsel %vm1160, %v1153, %v1157
        %v1162 = vand.u32 2147483647, %v1152
        %vm1163 = vcmp.eq.f32.partialorder %v1162, 8.507059e+37
        %v1164 = vand.u32 %v1152, 2147483648
        %v1165 = vor.u32 1.1754944e-38, %v1164
        %v1166 = vsel %vm1163, %v1165, %v1161
        %v1167 = vmul.f32 %v1149, %v1166
        %s1168 = sld [smem:[#allocation8 + $0x3]]
        %1169 = vrot.lane.b32.xlu0 %v790, 104
        %v1170 = vpop.permute.xlu0 %1169
        %v1173 = vsel %vm792, %v1167, 0
        %1175 = vmatpush.msra.mxu0 0.0
        %1176 = vmatpush.msra.mxu0 0.0
        %1177 = vmatpush.msra.mxu0 0.0
        %1178 = vmatpush.msra.mxu0 0.0
        %1179 = vmatpush.msra.mxu0 0.0
        %1180 = vmatpush.msra.mxu0 0.0
        %1181 = vmatpush.msra.mxu0 0.0
        %1182 = vmatpush.msra.mxu0 0.0
        %1183 = vmatpush.msra.mxu0 0.0
        %1184 = vmatpush.msra.mxu0 0.0
        %1185 = vmatpush.msra.mxu0 0.0
        %1186 = vmatpush.msra.mxu0 0.0
        %1187 = vmatpush.msra.mxu0 0.0
        %1188 = vmatpush.msra.mxu0 0.0
        %1189 = vmatpush.msra.mxu0 0.0
        %1190 = vmatpush.msra.mxu0 %v1170
        %1191 = vmatmul.f32.gmra.mxu0 %v1173
        %v1192 = vpop.f32.mrf.mxu0
        %v1193 = vadd.f32 0.0, %v1192
        %1194 = vdwg.mxu0
        %v1195 = vstv %s1168
        %v1196 = vmul.f32 %v1193, %v1195
        %v1197 = vld [vmem:[#allocation9 + $0x18] sm:$0xff]
        %v1199 = vsel %vm792, %v1196, 0
        %1201 = vmatpush.msra.mxu0 0.0
        %1202 = vmatpush.msra.mxu0 0.0
        %1203 = vmatpush.msra.mxu0 0.0
        %1204 = vmatpush.msra.mxu0 0.0
        %1205 = vmatpush.msra.mxu0 0.0
        %1206 = vmatpush.msra.mxu0 0.0
        %1207 = vmatpush.msra.mxu0 0.0
        %1208 = vmatpush.msra.mxu0 0.0
        %1209 = vmatpush.msra.mxu0 0.0
        %1210 = vmatpush.msra.mxu0 0.0
        %1211 = vmatpush.msra.mxu0 0.0
        %1212 = vmatpush.msra.mxu0 0.0
        %1213 = vmatpush.msra.mxu0 0.0
        %1214 = vmatpush.msra.mxu0 0.0
        %1215 = vmatpush.msra.mxu0 0.0
        %1216 = vmatpush.msra.mxu0 %v1197
        %1217 = vmatmul.f32.gmra.mxu0 %v1199
        %v1218 = vpop.f32.mrf.mxu0
        %v1219 = vadd.f32 0.0, %v1218
        %1220 = vdwg.mxu0
        %v1221 = vadd.f32 %v1113, %v1219
        %v1222 = vld [vmem:[%s10] sm:$0x1]
        %v1224 = vperm.slane %v1222, 0
        %v1226 = vadd.f32 %v1221, %v1224
        %v1227 = vadd.f32 %v702, %v1226
        %v1228 = vld [vmem:[%s11] sm:$0x1]
        %v1229 = vld [vmem:[%s12] sm:$0x1]
        %v1230 = vsel %vm712, %v1227, 0.0
        %1231 = vadd.xlane.f32.xlu0 %v1230
        %v1232 = vpop.xlane.xlu0 %1231
        %v1233 = vrcp.pop 32.0
        %v1234 = vmul.f32 32.0, %v1233
        %v1235 = vsub.f32 1.0, %v1234
        %v1236 = vmul.f32 %v1233, %v1235
        %v1237 = vadd.f32 %v1233, %v1236
        %vm1238 = vweird.f32 %v1233
        %v1239 = vsel %vm1238, %v1233, %v1237
        %v1240 = vmul.f32 %v1232, %v1239
        %v1241 = vsub.f32 %v1227, %v1240
        %v1242 = vmul.f32 %v1241, %v1241
        %v1243 = vsel %vm712, %v1242, 0.0
        %1244 = vadd.xlane.f32.xlu0 %v1243
        %v1245 = vpop.xlane.xlu0 %1244
        %v1246 = vmul.f32 %v1245, %v1239
        %v1247 = vadd.f32 %v1246, 1e-12
        %v1248 = vrsqrt.pop %v1247
        %v1249 = vmul.f32 %v1248, %v1247
        %v1250 = vmul.f32 %v1249, %v1248
        %v1251 = vmul.f32 0.5, %v1250
        %v1252 = vsub.f32 1.5, %v1251
        %v1253 = vmul.f32 %v1248, %v1252
        %vm1254 = vweird.f32 %v1247
        %vm1255 = vweird.f32 %v1248
        %vm1256 = vmor %vm1254, %vm1255
        %v1257 = vsel %vm1256, %v1248, %v1253
        %v1258 = vmul.f32 %v1241, %v1257
        %v1260 = vperm.slane %v1228, 0
        %v1262 = vmul.f32 %v1258, %v1260
        %v1264 = vperm.slane %v1229, 0
        %v1266 = vadd.f32 %v1262, %v1264
        %v1267 = vld [vmem:[#allocation10] sm:$0xff]
        %v1268 = vld [vmem:[#allocation10 + $0x8] sm:$0xff]
        %v1269 = vld [vmem:[#allocation10 + $0x10] sm:$0xff]
        %v1270 = vld [vmem:[#allocation10 + $0x18] sm:$0xff]
        %v1271 = vld [vmem:[%s14] sm:$0x1]
        %v1273 = vperm.slane %v1271, 0
        %v1276 = vsel %vm712, %v1266, 0
        %1278 = vmatpush.msra.mxu0 0.0
        %1279 = vmatpush.msra.mxu0 0.0
        %1280 = vmatpush.msra.mxu0 0.0
        %1281 = vmatpush.msra.mxu0 0.0
        %1282 = vmatpush.msra.mxu0 0.0
        %1283 = vmatpush.msra.mxu0 0.0
        %1284 = vmatpush.msra.mxu0 0.0
        %1285 = vmatpush.msra.mxu0 0.0
        %1286 = vmatpush.msra.mxu0 0.0
        %1287 = vmatpush.msra.mxu0 0.0
        %1288 = vmatpush.msra.mxu0 0.0
        %1289 = vmatpush.msra.mxu0 0.0
        %1290 = vmatpush.msra.mxu0 %v1270
        %1291 = vmatpush.msra.mxu0 %v1269
        %1292 = vmatpush.msra.mxu0 %v1268
        %1293 = vmatpush.msra.mxu0 %v1267
        %1294 = vmatmul.f32.gmra.mxu0 %v1276
        %v1295 = vpop.f32.mrf.mxu0
        %v1296 = vadd.f32 %v1273, %v1295
        %1297 = vdwg.mxu0
        %v1298 = vmul.f32 %v1296, 0.5
        %v1299 = vmul.f32 %v1296, 0.044715
        %v1300 = vmul.f32 %v1299, %v1296
        %v1301 = vmul.f32 %v1300, %v1296
        %v1302 = vadd.f32 %v1296, %v1301
        %v1303 = vmul.f32 %v1302, 0.7978846
        %v1304 = vtanh.pop %v1303
        %v1305 = vadd.f32 %v1304, 1.0
        %v1306 = vmul.f32 %v1298, %v1305
        %v1307 = vld [vmem:[%s15] sm:$0xff]
        %v1308 = vld [vmem:[%s15 + $0x8] sm:$0xff]
        %v1309 = vld [vmem:[%s15 + $0x10] sm:$0xff]
        %v1310 = vld [vmem:[%s15 + $0x18] sm:$0xff]
        %v1311 = vld [vmem:[%s15 + $0x20] sm:$0xff]
        %v1312 = vld [vmem:[%s15 + $0x28] sm:$0xff]
        %v1313 = vld [vmem:[%s15 + $0x30] sm:$0xff]
        %v1314 = vld [vmem:[%s15 + $0x38] sm:$0xff]
        %v1315 = vld [vmem:[%s16] sm:$0x1]
        %v1317 = vperm.slane %v1315, 0
        %vm1319 = vcmask 523264
        %v1321 = vsel %vm1319, %v1306, 0
        %1323 = vmatpush.msra.mxu0 0.0
        %1324 = vmatpush.msra.mxu0 0.0
        %1325 = vmatpush.msra.mxu0 0.0
        %1326 = vmatpush.msra.mxu0 0.0
        %1327 = vmatpush.msra.mxu0 0.0
        %1328 = vmatpush.msra.mxu0 0.0
        %1329 = vmatpush.msra.mxu0 0.0
        %1330 = vmatpush.msra.mxu0 0.0
        %1331 = vmatpush.msra.mxu0 %v1314
        %1332 = vmatpush.msra.mxu0 %v1313
        %1333 = vmatpush.msra.mxu0 %v1312
        %1334 = vmatpush.msra.mxu0 %v1311
        %1335 = vmatpush.msra.mxu0 %v1310
        %1336 = vmatpush.msra.mxu0 %v1309
        %1337 = vmatpush.msra.mxu0 %v1308
        %1338 = vmatpush.msra.mxu0 %v1307
        %1339 = vmatmul.f32.gmra.mxu0 %v1321
        %v1340 = vpop.f32.mrf.mxu0
        %v1341 = vadd.f32 %v1317, %v1340
        %1342 = vdwg.mxu0
        %v1343 = vadd.f32 %v1341, %v1266
        %v1344 = vld [vmem:[%s17] sm:$0x1]
        %v1345 = vld [vmem:[%s18] sm:$0x1]
        %v1346 = vsel %vm712, %v1343, 0.0
        %1347 = vadd.xlane.f32.xlu0 %v1346
        %v1348 = vpop.xlane.xlu0 %1347
        %v1349 = vmul.f32 %v1348, %v1239
        %v1350 = vsub.f32 %v1343, %v1349
        %v1351 = vmul.f32 %v1350, %v1350
        %v1352 = vsel %vm712, %v1351, 0.0
        %1353 = vadd.xlane.f32.xlu0 %v1352
        %v1354 = vpop.xlane.xlu0 %1353
        %v1355 = vmul.f32 %v1354, %v1239
        %v1356 = vadd.f32 %v1355, 1e-12
        %v1357 = vrsqrt.pop %v1356
        %v1358 = vmul.f32 %v1357, %v1356
        %v1359 = vmul.f32 %v1358, %v1357
        %v1360 = vmul.f32 0.5, %v1359
        %v1361 = vsub.f32 1.5, %v1360
        %v1362 = vmul.f32 %v1357, %v1361
        %vm1363 = vweird.f32 %v1356
        %vm1364 = vweird.f32 %v1357
        %vm1365 = vmor %vm1363, %vm1364
        %v1366 = vsel %vm1365, %v1357, %v1362
        %v1367 = vmul.f32 %v1350, %v1366
        %v1369 = vperm.slane %v1344, 0
        %v1371 = vmul.f32 %v1367, %v1369
        %v1373 = vperm.slane %v1345, 0
        %v1375 = vadd.f32 %v1371, %v1373
        %1376 = vst.msk [vmem:[%s701] sm:$0xff] %vm712, %v1375
        %s1377 = sand.u32 %s458, 1
        %s1378 = scalar_lea.sflag [#allocation4], %s1377
        %s1379 = sand.u32 %s458, 1
        %s1380 = smul.addr %s1379, 8
        %s1381 = scalar_lea.vmem [#allocation12], %s1380
        // Predicated region
        $region117: #{tpu_custom_call.1} parent=95 // pred_check
          %p1382 = pneg %p468
        $region118: #{tpu_custom_call.1} parent=95 // pred_check_branch
          %1384 = sbr.rel (%p1382) target = $region120
        $region119: #{tpu_custom_call.1} parent=95 // pred_region
          %1386 = vsyncadd %s1378, 0
          %s1387 = smul.addr %s41, 8
          %s1388 = scalar_lea.hbm %s19, %s1387
          %s1390 = sshll.u32 %s1381, 4
          %s1391 = int_to_ptr.vmem [resolvable:$true] %s1390
          %s1392 = sshll.u32 %s1388, 4
          %s1393 = int_to_ptr.hbm [resolvable:$true] %s1392
          %1395 = dma.vmem_to_hbm [thread:$0]  %s1391, 128, %s1393, %s1378
        $region120: #{tpu_custom_call.1} parent=95 // pred_fallthru
          _
      $region96: #{tpu_custom_call.1} parent=5 // pred_fallthru
        _
      %p1396 = scmp.le.s32.totalorder 2, %s36
      // Predicated region
      $region121: #{tpu_custom_call.1} parent=5 // pred_check
        %p1397 = pneg %p1396
      $region122: #{tpu_custom_call.1} parent=5 // pred_check_branch
        %1399 = sbr.rel (%p1397) target = $region124
      $region123: #{tpu_custom_call.1} parent=5 // pred_region
        %s1400 = ssub.s32 %s36, 2
        // Predicated region
        $region125: #{tpu_custom_call.1} parent=123 // pred_check
          %p1401 = pneg %p474
        $region126: #{tpu_custom_call.1} parent=123 // pred_check_branch
          %1403 = sbr.rel (%p1401) target = $region128
        $region127: #{tpu_custom_call.1} parent=123 // pred_region
          %s1404 = sand.u32 %s459, 1
          %s1405 = scalar_lea.sflag [#allocation4], %s1404
          %s1406 = sand.u32 %s459, 1
          %s1407 = smul.addr %s1406, 8
          %s1408 = scalar_lea.vmem [#allocation12], %s1407
          %1410 = dma.done %s1405, 128
        $region128: #{tpu_custom_call.1} parent=123 // pred_fallthru
          _
      $region124: #{tpu_custom_call.1} parent=5 // pred_fallthru
        _
    $region6: #{tpu_custom_call.1} parent=1 // loop_footer
      %s40 = sadd.s32 1, %s36
    $region7: #{tpu_custom_call.1} parent=1 // loop_footer_branch
      %35 = sbr.rel target = $region3
    $region8: #{tpu_custom_call.1} parent=1 // loop_exit
      _
    %1411 = vsyncpa [#allocation3], 1
    %s1412 = scalar_lea.sflag [#allocation3], 1
    %1413 = vsyncpa %s1412, 1
    %1414 = vsyncpa [#allocation7], 1
    %s1415 = scalar_lea.sflag [#allocation7], 1
    %1416 = vsyncpa %s1415, 1
    %1417 = vsyncpa [#allocation11], 1
    %1418 = vsyncpa [#allocation4], 1
    %s1419 = scalar_lea.sflag [#allocation4], 1
    %1420 = vsyncpa %s1419, 1
    %1421 = vsyncpa [#allocation5], 1
    %s1422 = scalar_lea.sflag [#allocation5], 1
    %1423 = vsyncpa %s1422, 1

</llo_original>
